<compile_context>
chip_gen: v6e
topology: v6e:2x2x1
jax: 0.10.0
libtpu: 0.0.40
codegen_flags: <defaults>
</compile_context>

<pallas_src>
import math
import functools

import jax
import jax.numpy as jnp
from jax.experimental import pallas as pl
from jax.experimental.pallas import tpu as pltpu


def pma_kernel(x_ref, s_ref,
               wq_ref, bq_ref, wkv_ref, bkv_ref, wo_ref, bo_ref,
               w1_ref, b1_ref, w2_ref, b2_ref,
               out_ref, *, num_heads, scale):
    """One grid step: (TB, N, D) batch tile -> (TB, num_seeds, D) pooled output."""
    TB, N, D = x_ref.shape
    S = s_ref.shape[0]
    dh = D // num_heads
    cdt = wq_ref.dtype                       # MXU operand dtype (f32 or bf16)

    # ---- flat 2D K/V projection: one GEMM, M = TB*N rows on the sublane axis ----
    x = x_ref[...].reshape(TB * N, D)
    kv = jnp.dot(x.astype(cdt), wkv_ref[...],
                 preferred_element_type=jnp.float32) + bkv_ref[...]       # (TB*N, 2D)
    k_p = kv[:, :D]
    v_p = kv[:, D:]

    # ---- Q projection: seeds are shared across the batch, compute once ----
    s = s_ref[...]                                                        # (S, D) f32
    q_p = jnp.dot(s.astype(cdt), wq_ref[...],
                  preferred_element_type=jnp.float32) + bq_ref[...]       # (S, D)
    q_p = q_p * scale            # fold 1/sqrt(D) into Q (== scaling E)

    # ---- per-head attention; head-concat folded into Wo row blocks ----
    wo = wo_ref[...]
    acc = jnp.zeros((TB * S, D), jnp.float32)
    for h in range(num_heads):
        lo, hi = h * dh, (h + 1) * dh
        qh = jnp.broadcast_to(q_p[:, lo:hi], (TB, S, dh))
        kh = k_p[:, lo:hi].reshape(TB, N, dh)
        vh = v_p[:, lo:hi].reshape(TB, N, dh)
        e = jnp.einsum('bsd,bnd->bsn', qh.astype(cdt), kh.astype(cdt),
                       preferred_element_type=jnp.float32)                # (TB, S, N)
        e = e - jnp.max(e, axis=-1, keepdims=True)
        p = jnp.exp(e)
        a = p / jnp.sum(p, axis=-1, keepdims=True)
        oh = jnp.einsum('bsn,bnd->bsd', a.astype(cdt), vh.astype(cdt),
                        preferred_element_type=jnp.float32)               # (TB, S, dh)
        acc = acc + jnp.dot(oh.reshape(TB * S, dh).astype(cdt), wo[lo:hi, :],
                            preferred_element_type=jnp.float32)
    attn = acc + bo_ref[...]                                              # (TB*S, D)

    # ---- MAB residuals + position-wise FFN (flat 2D GEMMs) ----
    x1 = attn.reshape(TB, S, D) + s              # residual with raw seeds Q
    x1f = x1.reshape(TB * S, D)
    hdn = jnp.maximum(
        jnp.dot(x1f.astype(cdt), w1_ref[...],
                preferred_element_type=jnp.float32) + b1_ref[...], 0.0)
    ffn = jnp.dot(hdn.astype(cdt), w2_ref[...],
                  preferred_element_type=jnp.float32) + b2_ref[...]
    y = x1f + ffn
    out_ref[...] = y.reshape(TB, S, D).astype(out_ref.dtype)


def _default_batch_tile(B, N):
    """Largest divisor of B giving >= 2 grid steps (pipelining / megacore) and
    keeping TB*N around <= 512 rows per tile."""
    cap = max(1, 512 // max(N, 1))
    best = 1
    for tb in range(1, B + 1):
        if B % tb == 0 and tb <= cap and (B // tb) >= 2:
            best = tb
    return best


def pma_forward(x, params, *, num_heads, batch_tile=None,
                compute_dtype=jnp.float32):
    """x: (B, N, D) float32. params: dict of seeds 'S' and (in,out)-layout weights."""
    B, N, D = x.shape
    s = params['S']
    num_seeds = s.shape[0]
    assert D % num_heads == 0

    TB = _default_batch_tile(B, N) if batch_tile is None else batch_tile
    assert B % TB == 0

    # Pack K/V projection into one wider GEMM (fewer grid-invariant operands).
    wkv = jnp.concatenate([params['wk'], params['wv']], axis=1).astype(compute_dtype)
    bkv = jnp.concatenate([params['bk'], params['bv']], axis=1)
    weights = (
        s,                                     # seeds stay f32 (used in residual)
        params['wq'].astype(compute_dtype), params['bq'],
        wkv, bkv,
        params['wo'].astype(compute_dtype), params['bo'],
        params['w1'].astype(compute_dtype), params['b1'],
        params['w2'].astype(compute_dtype), params['b2'],
    )
    x_in = x.astype(compute_dtype)

    def whole(a):
        nd = a.ndim
        return pl.BlockSpec(a.shape, lambda i, _nd=nd: (0,) * _nd)

    kernel = functools.partial(pma_kernel, num_heads=num_heads,
                               scale=1.0 / math.sqrt(D))
    return pl.pallas_call(
        kernel,
        grid=(B // TB,),
        in_specs=[pl.BlockSpec((TB, N, D), lambda i: (i, 0, 0))]
                 + [whole(a) for a in weights],
        out_specs=pl.BlockSpec((TB, num_seeds, D), lambda i: (i, 0, 0)),
        out_shape=jax.ShapeDtypeStruct((B, num_seeds, D), jnp.float32),
        compiler_params=pltpu.CompilerParams(
            dimension_semantics=("parallel",)),
    )(x_in, *weights)


def _init_linear(key, fan_in, fan_out):
    """PyTorch nn.Linear default init; weight returned as (fan_in, fan_out)."""
    kw, kb = jax.random.split(key)
    bound = 1.0 / math.sqrt(fan_in)
    w = jax.random.uniform(kw, (fan_in, fan_out), jnp.float32, -bound, bound)
    b = jax.random.uniform(kb, (1, fan_out), jnp.float32, -bound, bound)
    return w, b


def make_params(key, latent_size, hidden_size, num_seeds):
    ks = jax.random.split(key, 7)
    # Seeds: xavier_uniform on a (1, num_seeds, latent) tensor.
    fan_in, fan_out = num_seeds * latent_size, latent_size
    bound = math.sqrt(6.0 / (fan_in + fan_out))
    S = jax.random.uniform(ks[0], (num_seeds, latent_size), jnp.float32, -bound, bound)
    wq, bq = _init_linear(ks[1], latent_size, latent_size)
    wk, bk = _init_linear(ks[2], latent_size, latent_size)
    wv, bv = _init_linear(ks[3], latent_size, latent_size)
    wo, bo = _init_linear(ks[4], latent_size, latent_size)
    w1, b1 = _init_linear(ks[5], latent_size, hidden_size)
    w2, b2 = _init_linear(ks[6], hidden_size, latent_size)
    return dict(S=S, wq=wq, bq=bq, wk=wk, bk=bk, wv=wv, bv=bv, wo=wo, bo=bo,
                w1=w1, b1=b1, w2=w2, b2=b2)


def pma_reference(x, p, num_heads):
    """Pure-JAX reference matching the PyTorch PMA forward (eval mode)."""
    B, N, D = x.shape
    s = p['S']
    S = s.shape[0]
    q_in = jnp.broadcast_to(s, (B, S, D))
    q = q_in @ p['wq'] + p['bq']
    k = x @ p['wk'] + p['bk']
    v = x @ p['wv'] + p['bv']

    def heads(t):                              # (B, L, D) -> (H, B, L, dh)
        return jnp.stack(jnp.split(t, num_heads, axis=2), axis=0)

    qh, kh, vh = heads(q), heads(k), heads(v)
    e = qh @ jnp.swapaxes(kh, 2, 3) / math.sqrt(D)       # (H, B, S, N)
    a = jax.nn.softmax(e, axis=3)
    o = a @ vh                                           # (H, B, S, dh)
    o = jnp.concatenate(jnp.split(o, num_heads, axis=0), axis=3)[0]   # (B, S, D)
    o = o @ p['wo'] + p['bo']
    x1 = q_in + o
    h = jnp.maximum(x1 @ p['w1'] + p['b1'], 0.0)
    return x1 + h @ p['w2'] + p['b2']


if __name__ == "__main__":
    key = jax.random.PRNGKey(0)
    k_x, k_p = jax.random.split(key)

    # Small shapes consistent with the module.
    B, N = 4, 8                      # batch, set size
    latent_size, hidden_size = 16, 32
    num_heads, num_seeds = 4, 4

    x = jax.random.normal(k_x, (B, N, latent_size), jnp.float32)
    params = make_params(k_p, latent_size, hidden_size, num_seeds)

    out = pma_forward(x, params, num_heads=num_heads)
    out = jax.block_until_ready(out)

    ref = pma_reference(x, params, num_heads)
    assert out.shape == (B, num_seeds, latent_size)
    err = jnp.max(jnp.abs(out - ref))
    assert jnp.allclose(out, ref, atol=1e-4, rtol=1e-4), f"max abs err {err}"

    print("KERNEL_OK")
</pallas_src>

<mosaic_0001>
module attributes {stable_mosaic.version = 11 : i64} {
  func.func @pma_kernel(%arg0: i32, %arg1: memref<2x8x16xf32, #tpu.memory_space<vmem>>, %arg2: memref<4x16xf32, #tpu.memory_space<vmem>>, %arg3: memref<16x16xf32, #tpu.memory_space<vmem>>, %arg4: memref<1x16xf32, #tpu.memory_space<vmem>>, %arg5: memref<16x32xf32, #tpu.memory_space<vmem>>, %arg6: memref<1x32xf32, #tpu.memory_space<vmem>>, %arg7: memref<16x16xf32, #tpu.memory_space<vmem>>, %arg8: memref<1x16xf32, #tpu.memory_space<vmem>>, %arg9: memref<16x32xf32, #tpu.memory_space<vmem>>, %arg10: memref<1x32xf32, #tpu.memory_space<vmem>>, %arg11: memref<32x16xf32, #tpu.memory_space<vmem>>, %arg12: memref<1x16xf32, #tpu.memory_space<vmem>>, %arg13: memref<2x4x16xf32, #tpu.memory_space<vmem>>) attributes {dimension_semantics = [#tpu.dimension_semantics<parallel>], iteration_bounds = array<i64: 2>, scalar_prefetch = 0 : i64, scratch_operands = 0 : i64, tpu.core_type = #tpu.core_type<tc>, window_params = [{transform_indices = @transform_0, window_bounds = array<i64: 2, 8, 16>}, {pipeline_mode = #tpu.pipeline_mode<synchronous>, transform_indices = @transform_1, window_bounds = array<i64: 4, 16>}, {pipeline_mode = #tpu.pipeline_mode<synchronous>, transform_indices = @transform_2, window_bounds = array<i64: 16, 16>}, {pipeline_mode = #tpu.pipeline_mode<synchronous>, transform_indices = @transform_3, window_bounds = array<i64: 1, 16>}, {pipeline_mode = #tpu.pipeline_mode<synchronous>, transform_indices = @transform_4, window_bounds = array<i64: 16, 32>}, {pipeline_mode = #tpu.pipeline_mode<synchronous>, transform_indices = @transform_5, window_bounds = array<i64: 1, 32>}, {pipeline_mode = #tpu.pipeline_mode<synchronous>, transform_indices = @transform_6, window_bounds = array<i64: 16, 16>}, {pipeline_mode = #tpu.pipeline_mode<synchronous>, transform_indices = @transform_7, window_bounds = array<i64: 1, 16>}, {pipeline_mode = #tpu.pipeline_mode<synchronous>, transform_indices = @transform_8, window_bounds = array<i64: 16, 32>}, {pipeline_mode = #tpu.pipeline_mode<synchronous>, transform_indices = @transform_9, window_bounds = array<i64: 1, 32>}, {pipeline_mode = #tpu.pipeline_mode<synchronous>, transform_indices = @transform_10, window_bounds = array<i64: 32, 16>}, {pipeline_mode = #tpu.pipeline_mode<synchronous>, transform_indices = @transform_11, window_bounds = array<i64: 1, 16>}, {transform_indices = @transform_12, window_bounds = array<i64: 2, 4, 16>}]} {
    %c0 = arith.constant 0 : index
    %c0_0 = arith.constant 0 : index
    %c0_1 = arith.constant 0 : index
    %0 = vector.load %arg1[%c0, %c0_0, %c0_1] : memref<2x8x16xf32, #tpu.memory_space<vmem>>, vector<2x8x16xf32>
    %1 = vector.shape_cast %0 : vector<2x8x16xf32> to vector<16x16xf32>
    %c0_2 = arith.constant 0 : index
    %c0_3 = arith.constant 0 : index
    %2 = vector.load %arg5[%c0_2, %c0_3] : memref<16x32xf32, #tpu.memory_space<vmem>>, vector<16x32xf32>
    %cst = arith.constant dense<0.000000e+00> : vector<16x32xf32>
    %3 = tpu.matmul %1, %2, %cst {dimension_numbers = #tpu.dot_dimension_numbers<[1], [0], [0], [1], [0, 0, 1, 1], [], []>} : vector<16x16xf32>, vector<16x32xf32>, vector<16x32xf32> -> vector<16x32xf32>
    %c0_4 = arith.constant 0 : index
    %c0_5 = arith.constant 0 : index
    %4 = vector.load %arg6[%c0_4, %c0_5] : memref<1x32xf32, #tpu.memory_space<vmem>>, vector<1x32xf32>
    %5 = vector.broadcast %4 : vector<1x32xf32> to vector<16x32xf32>
    %6 = arith.addf %3, %5 : vector<16x32xf32>
    %7 = vector.extract_strided_slice %6 {offsets = [0, 0], sizes = [16, 16], strides = [1, 1]} : vector<16x32xf32> to vector<16x16xf32>
    %8 = vector.extract_strided_slice %6 {offsets = [0, 16], sizes = [16, 16], strides = [1, 1]} : vector<16x32xf32> to vector<16x16xf32>
    %c0_6 = arith.constant 0 : index
    %c0_7 = arith.constant 0 : index
    %9 = vector.load %arg2[%c0_6, %c0_7] : memref<4x16xf32, #tpu.memory_space<vmem>>, vector<4x16xf32>
    %c0_8 = arith.constant 0 : index
    %c0_9 = arith.constant 0 : index
    %10 = vector.load %arg3[%c0_8, %c0_9] : memref<16x16xf32, #tpu.memory_space<vmem>>, vector<16x16xf32>
    %cst_10 = arith.constant dense<0.000000e+00> : vector<4x16xf32>
    %11 = tpu.matmul %9, %10, %cst_10 {dimension_numbers = #tpu.dot_dimension_numbers<[1], [0], [0], [1], [0, 0, 1, 1], [], []>} : vector<4x16xf32>, vector<16x16xf32>, vector<4x16xf32> -> vector<4x16xf32>
    %c0_11 = arith.constant 0 : index
    %c0_12 = arith.constant 0 : index
    %12 = vector.load %arg4[%c0_11, %c0_12] : memref<1x16xf32, #tpu.memory_space<vmem>>, vector<1x16xf32>
    %13 = vector.broadcast %12 : vector<1x16xf32> to vector<4x16xf32>
    %14 = arith.addf %11, %13 : vector<4x16xf32>
    %cst_13 = arith.constant 2.500000e-01 : f32
    %15 = vector.broadcast %cst_13 : f32 to vector<4x16xf32>
    %16 = arith.mulf %14, %15 : vector<4x16xf32>
    %c0_14 = arith.constant 0 : index
    %c0_15 = arith.constant 0 : index
    %17 = vector.load %arg7[%c0_14, %c0_15] : memref<16x16xf32, #tpu.memory_space<vmem>>, vector<16x16xf32>
    %cst_16 = arith.constant 0.000000e+00 : f32
    %18 = vector.broadcast %cst_16 : f32 to vector<8x16xf32>
    %19 = vector.extract_strided_slice %16 {offsets = [0, 0], sizes = [4, 4], strides = [1, 1]} : vector<4x16xf32> to vector<4x4xf32>
    %20 = vector.shape_cast %19 : vector<4x4xf32> to vector<1x4x4xf32>
    %21 = vector.broadcast %20 : vector<1x4x4xf32> to vector<2x4x4xf32>
    %22 = vector.extract_strided_slice %7 {offsets = [0, 0], sizes = [16, 4], strides = [1, 1]} : vector<16x16xf32> to vector<16x4xf32>
    %23 = vector.shape_cast %22 : vector<16x4xf32> to vector<2x8x4xf32>
    %24 = vector.extract_strided_slice %8 {offsets = [0, 0], sizes = [16, 4], strides = [1, 1]} : vector<16x16xf32> to vector<16x4xf32>
    %25 = vector.shape_cast %24 : vector<16x4xf32> to vector<2x8x4xf32>
    "tpu.trace_start"() <{level = 10 : i32, message = "bsd,bnd->bsn"}> : () -> ()
    %cst_17 = arith.constant dense<0.000000e+00> : vector<2x4x8xf32>
    %26 = tpu.matmul %21, %23, %cst_17 {dimension_numbers = #tpu.dot_dimension_numbers<[2], [2], [1], [1], [0, 0, 0, 1, 1, 1], [0], [0]>} : vector<2x4x4xf32>, vector<2x8x4xf32>, vector<2x4x8xf32> -> vector<2x4x8xf32>
    "tpu.trace_stop"() : () -> ()
    %cst_18 = arith.constant dense<0xFF800000> : vector<2x4xf32>
    %27 = vector.multi_reduction <maximumf>, %26, %cst_18 [2] : vector<2x4x8xf32> to vector<2x4xf32>
    %28 = vector.shape_cast %27 : vector<2x4xf32> to vector<2x4x1xf32>
    %29 = vector.broadcast %28 : vector<2x4x1xf32> to vector<2x4x8xf32>
    %30 = arith.subf %26, %29 : vector<2x4x8xf32>
    %31 = math.exp %30 : vector<2x4x8xf32>
    %cst_19 = arith.constant dense<0.000000e+00> : vector<2x4xf32>
    %32 = vector.multi_reduction <add>, %31, %cst_19 [2] : vector<2x4x8xf32> to vector<2x4xf32>
    %33 = vector.shape_cast %32 : vector<2x4xf32> to vector<2x4x1xf32>
    %34 = vector.broadcast %33 : vector<2x4x1xf32> to vector<2x4x8xf32>
    %35 = arith.divf %31, %34 : vector<2x4x8xf32>
    "tpu.trace_start"() <{level = 10 : i32, message = "bsn,bnd->bsd"}> : () -> ()
    %cst_20 = arith.constant dense<0.000000e+00> : vector<2x4x4xf32>
    %36 = tpu.matmul %35, %25, %cst_20 {dimension_numbers = #tpu.dot_dimension_numbers<[2], [1], [1], [2], [0, 0, 0, 1, 1, 2], [0], [0]>} : vector<2x4x8xf32>, vector<2x8x4xf32>, vector<2x4x4xf32> -> vector<2x4x4xf32>
    "tpu.trace_stop"() : () -> ()
    %37 = vector.shape_cast %36 : vector<2x4x4xf32> to vector<8x4xf32>
    %38 = vector.extract_strided_slice %17 {offsets = [0, 0], sizes = [4, 16], strides = [1, 1]} : vector<16x16xf32> to vector<4x16xf32>
    %cst_21 = arith.constant dense<0.000000e+00> : vector<8x16xf32>
    %39 = tpu.matmul %37, %38, %cst_21 {dimension_numbers = #tpu.dot_dimension_numbers<[1], [0], [0], [1], [0, 0, 1, 1], [], []>} : vector<8x4xf32>, vector<4x16xf32>, vector<8x16xf32> -> vector<8x16xf32>
    %40 = arith.addf %18, %39 : vector<8x16xf32>
    %41 = vector.extract_strided_slice %16 {offsets = [0, 4], sizes = [4, 4], strides = [1, 1]} : vector<4x16xf32> to vector<4x4xf32>
    %42 = vector.shape_cast %41 : vector<4x4xf32> to vector<1x4x4xf32>
    %43 = vector.broadcast %42 : vector<1x4x4xf32> to vector<2x4x4xf32>
    %44 = vector.extract_strided_slice %7 {offsets = [0, 4], sizes = [16, 4], strides = [1, 1]} : vector<16x16xf32> to vector<16x4xf32>
    %45 = vector.shape_cast %44 : vector<16x4xf32> to vector<2x8x4xf32>
    %46 = vector.extract_strided_slice %8 {offsets = [0, 4], sizes = [16, 4], strides = [1, 1]} : vector<16x16xf32> to vector<16x4xf32>
    %47 = vector.shape_cast %46 : vector<16x4xf32> to vector<2x8x4xf32>
    "tpu.trace_start"() <{level = 10 : i32, message = "bsd,bnd->bsn"}> : () -> ()
    %cst_22 = arith.constant dense<0.000000e+00> : vector<2x4x8xf32>
    %48 = tpu.matmul %43, %45, %cst_22 {dimension_numbers = #tpu.dot_dimension_numbers<[2], [2], [1], [1], [0, 0, 0, 1, 1, 1], [0], [0]>} : vector<2x4x4xf32>, vector<2x8x4xf32>, vector<2x4x8xf32> -> vector<2x4x8xf32>
    "tpu.trace_stop"() : () -> ()
    %cst_23 = arith.constant dense<0xFF800000> : vector<2x4xf32>
    %49 = vector.multi_reduction <maximumf>, %48, %cst_23 [2] : vector<2x4x8xf32> to vector<2x4xf32>
    %50 = vector.shape_cast %49 : vector<2x4xf32> to vector<2x4x1xf32>
    %51 = vector.broadcast %50 : vector<2x4x1xf32> to vector<2x4x8xf32>
    %52 = arith.subf %48, %51 : vector<2x4x8xf32>
    %53 = math.exp %52 : vector<2x4x8xf32>
    %cst_24 = arith.constant dense<0.000000e+00> : vector<2x4xf32>
    %54 = vector.multi_reduction <add>, %53, %cst_24 [2] : vector<2x4x8xf32> to vector<2x4xf32>
    %55 = vector.shape_cast %54 : vector<2x4xf32> to vector<2x4x1xf32>
    %56 = vector.broadcast %55 : vector<2x4x1xf32> to vector<2x4x8xf32>
    %57 = arith.divf %53, %56 : vector<2x4x8xf32>
    "tpu.trace_start"() <{level = 10 : i32, message = "bsn,bnd->bsd"}> : () -> ()
    %cst_25 = arith.constant dense<0.000000e+00> : vector<2x4x4xf32>
    %58 = tpu.matmul %57, %47, %cst_25 {dimension_numbers = #tpu.dot_dimension_numbers<[2], [1], [1], [2], [0, 0, 0, 1, 1, 2], [0], [0]>} : vector<2x4x8xf32>, vector<2x8x4xf32>, vector<2x4x4xf32> -> vector<2x4x4xf32>
    "tpu.trace_stop"() : () -> ()
    %59 = vector.shape_cast %58 : vector<2x4x4xf32> to vector<8x4xf32>
    %60 = vector.extract_strided_slice %17 {offsets = [4, 0], sizes = [4, 16], strides = [1, 1]} : vector<16x16xf32> to vector<4x16xf32>
    %cst_26 = arith.constant dense<0.000000e+00> : vector<8x16xf32>
    %61 = tpu.matmul %59, %60, %cst_26 {dimension_numbers = #tpu.dot_dimension_numbers<[1], [0], [0], [1], [0, 0, 1, 1], [], []>} : vector<8x4xf32>, vector<4x16xf32>, vector<8x16xf32> -> vector<8x16xf32>
    %62 = arith.addf %40, %61 : vector<8x16xf32>
    %63 = vector.extract_strided_slice %16 {offsets = [0, 8], sizes = [4, 4], strides = [1, 1]} : vector<4x16xf32> to vector<4x4xf32>
    %64 = vector.shape_cast %63 : vector<4x4xf32> to vector<1x4x4xf32>
    %65 = vector.broadcast %64 : vector<1x4x4xf32> to vector<2x4x4xf32>
    %66 = vector.extract_strided_slice %7 {offsets = [0, 8], sizes = [16, 4], strides = [1, 1]} : vector<16x16xf32> to vector<16x4xf32>
    %67 = vector.shape_cast %66 : vector<16x4xf32> to vector<2x8x4xf32>
    %68 = vector.extract_strided_slice %8 {offsets = [0, 8], sizes = [16, 4], strides = [1, 1]} : vector<16x16xf32> to vector<16x4xf32>
    %69 = vector.shape_cast %68 : vector<16x4xf32> to vector<2x8x4xf32>
    "tpu.trace_start"() <{level = 10 : i32, message = "bsd,bnd->bsn"}> : () -> ()
    %cst_27 = arith.constant dense<0.000000e+00> : vector<2x4x8xf32>
    %70 = tpu.matmul %65, %67, %cst_27 {dimension_numbers = #tpu.dot_dimension_numbers<[2], [2], [1], [1], [0, 0, 0, 1, 1, 1], [0], [0]>} : vector<2x4x4xf32>, vector<2x8x4xf32>, vector<2x4x8xf32> -> vector<2x4x8xf32>
    "tpu.trace_stop"() : () -> ()
    %cst_28 = arith.constant dense<0xFF800000> : vector<2x4xf32>
    %71 = vector.multi_reduction <maximumf>, %70, %cst_28 [2] : vector<2x4x8xf32> to vector<2x4xf32>
    %72 = vector.shape_cast %71 : vector<2x4xf32> to vector<2x4x1xf32>
    %73 = vector.broadcast %72 : vector<2x4x1xf32> to vector<2x4x8xf32>
    %74 = arith.subf %70, %73 : vector<2x4x8xf32>
    %75 = math.exp %74 : vector<2x4x8xf32>
    %cst_29 = arith.constant dense<0.000000e+00> : vector<2x4xf32>
    %76 = vector.multi_reduction <add>, %75, %cst_29 [2] : vector<2x4x8xf32> to vector<2x4xf32>
    %77 = vector.shape_cast %76 : vector<2x4xf32> to vector<2x4x1xf32>
    %78 = vector.broadcast %77 : vector<2x4x1xf32> to vector<2x4x8xf32>
    %79 = arith.divf %75, %78 : vector<2x4x8xf32>
    "tpu.trace_start"() <{level = 10 : i32, message = "bsn,bnd->bsd"}> : () -> ()
    %cst_30 = arith.constant dense<0.000000e+00> : vector<2x4x4xf32>
    %80 = tpu.matmul %79, %69, %cst_30 {dimension_numbers = #tpu.dot_dimension_numbers<[2], [1], [1], [2], [0, 0, 0, 1, 1, 2], [0], [0]>} : vector<2x4x8xf32>, vector<2x8x4xf32>, vector<2x4x4xf32> -> vector<2x4x4xf32>
    "tpu.trace_stop"() : () -> ()
    %81 = vector.shape_cast %80 : vector<2x4x4xf32> to vector<8x4xf32>
    %82 = vector.extract_strided_slice %17 {offsets = [8, 0], sizes = [4, 16], strides = [1, 1]} : vector<16x16xf32> to vector<4x16xf32>
    %cst_31 = arith.constant dense<0.000000e+00> : vector<8x16xf32>
    %83 = tpu.matmul %81, %82, %cst_31 {dimension_numbers = #tpu.dot_dimension_numbers<[1], [0], [0], [1], [0, 0, 1, 1], [], []>} : vector<8x4xf32>, vector<4x16xf32>, vector<8x16xf32> -> vector<8x16xf32>
    %84 = arith.addf %62, %83 : vector<8x16xf32>
    %85 = vector.extract_strided_slice %16 {offsets = [0, 12], sizes = [4, 4], strides = [1, 1]} : vector<4x16xf32> to vector<4x4xf32>
    %86 = vector.shape_cast %85 : vector<4x4xf32> to vector<1x4x4xf32>
    %87 = vector.broadcast %86 : vector<1x4x4xf32> to vector<2x4x4xf32>
    %88 = vector.extract_strided_slice %7 {offsets = [0, 12], sizes = [16, 4], strides = [1, 1]} : vector<16x16xf32> to vector<16x4xf32>
    %89 = vector.shape_cast %88 : vector<16x4xf32> to vector<2x8x4xf32>
    %90 = vector.extract_strided_slice %8 {offsets = [0, 12], sizes = [16, 4], strides = [1, 1]} : vector<16x16xf32> to vector<16x4xf32>
    %91 = vector.shape_cast %90 : vector<16x4xf32> to vector<2x8x4xf32>
    "tpu.trace_start"() <{level = 10 : i32, message = "bsd,bnd->bsn"}> : () -> ()
    %cst_32 = arith.constant dense<0.000000e+00> : vector<2x4x8xf32>
    %92 = tpu.matmul %87, %89, %cst_32 {dimension_numbers = #tpu.dot_dimension_numbers<[2], [2], [1], [1], [0, 0, 0, 1, 1, 1], [0], [0]>} : vector<2x4x4xf32>, vector<2x8x4xf32>, vector<2x4x8xf32> -> vector<2x4x8xf32>
    "tpu.trace_stop"() : () -> ()
    %cst_33 = arith.constant dense<0xFF800000> : vector<2x4xf32>
    %93 = vector.multi_reduction <maximumf>, %92, %cst_33 [2] : vector<2x4x8xf32> to vector<2x4xf32>
    %94 = vector.shape_cast %93 : vector<2x4xf32> to vector<2x4x1xf32>
    %95 = vector.broadcast %94 : vector<2x4x1xf32> to vector<2x4x8xf32>
    %96 = arith.subf %92, %95 : vector<2x4x8xf32>
    %97 = math.exp %96 : vector<2x4x8xf32>
    %cst_34 = arith.constant dense<0.000000e+00> : vector<2x4xf32>
    %98 = vector.multi_reduction <add>, %97, %cst_34 [2] : vector<2x4x8xf32> to vector<2x4xf32>
    %99 = vector.shape_cast %98 : vector<2x4xf32> to vector<2x4x1xf32>
    %100 = vector.broadcast %99 : vector<2x4x1xf32> to vector<2x4x8xf32>
    %101 = arith.divf %97, %100 : vector<2x4x8xf32>
    "tpu.trace_start"() <{level = 10 : i32, message = "bsn,bnd->bsd"}> : () -> ()
    %cst_35 = arith.constant dense<0.000000e+00> : vector<2x4x4xf32>
    %102 = tpu.matmul %101, %91, %cst_35 {dimension_numbers = #tpu.dot_dimension_numbers<[2], [1], [1], [2], [0, 0, 0, 1, 1, 2], [0], [0]>} : vector<2x4x8xf32>, vector<2x8x4xf32>, vector<2x4x4xf32> -> vector<2x4x4xf32>
    "tpu.trace_stop"() : () -> ()
    %103 = vector.shape_cast %102 : vector<2x4x4xf32> to vector<8x4xf32>
    %104 = vector.extract_strided_slice %17 {offsets = [12, 0], sizes = [4, 16], strides = [1, 1]} : vector<16x16xf32> to vector<4x16xf32>
    %cst_36 = arith.constant dense<0.000000e+00> : vector<8x16xf32>
    %105 = tpu.matmul %103, %104, %cst_36 {dimension_numbers = #tpu.dot_dimension_numbers<[1], [0], [0], [1], [0, 0, 1, 1], [], []>} : vector<8x4xf32>, vector<4x16xf32>, vector<8x16xf32> -> vector<8x16xf32>
    %106 = arith.addf %84, %105 : vector<8x16xf32>
    %c0_37 = arith.constant 0 : index
    %c0_38 = arith.constant 0 : index
    %107 = vector.load %arg8[%c0_37, %c0_38] : memref<1x16xf32, #tpu.memory_space<vmem>>, vector<1x16xf32>
    %108 = vector.broadcast %107 : vector<1x16xf32> to vector<8x16xf32>
    %109 = arith.addf %106, %108 : vector<8x16xf32>
    %110 = vector.shape_cast %109 : vector<8x16xf32> to vector<2x4x16xf32>
    %111 = vector.shape_cast %9 : vector<4x16xf32> to vector<1x4x16xf32>
    %112 = vector.broadcast %111 : vector<1x4x16xf32> to vector<2x4x16xf32>
    %113 = arith.addf %110, %112 : vector<2x4x16xf32>
    %114 = vector.shape_cast %113 : vector<2x4x16xf32> to vector<8x16xf32>
    %c0_39 = arith.constant 0 : index
    %c0_40 = arith.constant 0 : index
    %115 = vector.load %arg9[%c0_39, %c0_40] : memref<16x32xf32, #tpu.memory_space<vmem>>, vector<16x32xf32>
    %cst_41 = arith.constant dense<0.000000e+00> : vector<8x32xf32>
    %116 = tpu.matmul %114, %115, %cst_41 {dimension_numbers = #tpu.dot_dimension_numbers<[1], [0], [0], [1], [0, 0, 1, 1], [], []>} : vector<8x16xf32>, vector<16x32xf32>, vector<8x32xf32> -> vector<8x32xf32>
    %c0_42 = arith.constant 0 : index
    %c0_43 = arith.constant 0 : index
    %117 = vector.load %arg10[%c0_42, %c0_43] : memref<1x32xf32, #tpu.memory_space<vmem>>, vector<1x32xf32>
    %118 = vector.broadcast %117 : vector<1x32xf32> to vector<8x32xf32>
    %119 = arith.addf %116, %118 : vector<8x32xf32>
    %cst_44 = arith.constant 0.000000e+00 : f32
    %120 = vector.broadcast %cst_44 : f32 to vector<8x32xf32>
    %121 = arith.maximumf %119, %120 : vector<8x32xf32>
    %c0_45 = arith.constant 0 : index
    %c0_46 = arith.constant 0 : index
    %122 = vector.load %arg11[%c0_45, %c0_46] : memref<32x16xf32, #tpu.memory_space<vmem>>, vector<32x16xf32>
    %cst_47 = arith.constant dense<0.000000e+00> : vector<8x16xf32>
    %123 = tpu.matmul %121, %122, %cst_47 {dimension_numbers = #tpu.dot_dimension_numbers<[1], [0], [0], [1], [0, 0, 1, 1], [], []>} : vector<8x32xf32>, vector<32x16xf32>, vector<8x16xf32> -> vector<8x16xf32>
    %c0_48 = arith.constant 0 : index
    %c0_49 = arith.constant 0 : index
    %124 = vector.load %arg12[%c0_48, %c0_49] : memref<1x16xf32, #tpu.memory_space<vmem>>, vector<1x16xf32>
    %125 = vector.broadcast %124 : vector<1x16xf32> to vector<8x16xf32>
    %126 = arith.addf %123, %125 : vector<8x16xf32>
    %127 = arith.addf %114, %126 : vector<8x16xf32>
    %128 = vector.shape_cast %127 : vector<8x16xf32> to vector<2x4x16xf32>
    %c0_50 = arith.constant 0 : index
    %c0_51 = arith.constant 0 : index
    %c0_52 = arith.constant 0 : index
    %129 = vector.load %arg13[%c0_50, %c0_51, %c0_52] : memref<2x4x16xf32, #tpu.memory_space<vmem>>, vector<2x4x16xf32>
    tpu.vector_store %arg13[%c0_50, %c0_51, %c0_52], %128 {strides = array<i32>} : memref<2x4x16xf32, #tpu.memory_space<vmem>>, vector<2x4x16xf32>,
    return
  }
  func.func @transform_0(%arg0: i32) -> (i32, i32, i32) {
    %c0_i32 = arith.constant 0 : i32
    %c0_i32_0 = arith.constant 0 : i32
    %c0_i32_1 = arith.constant 0 : i32
    return %arg0, %c0_i32, %c0_i32_0 : i32, i32, i32
  }
  func.func @transform_1(%arg0: i32) -> (i32, i32) {
    %c0_i32 = arith.constant 0 : i32
    %c0_i32_0 = arith.constant 0 : i32
    %c0_i32_1 = arith.constant 0 : i32
    return %c0_i32, %c0_i32_0 : i32, i32
  }
  func.func @transform_2(%arg0: i32) -> (i32, i32) {
    %c0_i32 = arith.constant 0 : i32
    %c0_i32_0 = arith.constant 0 : i32
    %c0_i32_1 = arith.constant 0 : i32
    return %c0_i32, %c0_i32_0 : i32, i32
  }
  func.func @transform_3(%arg0: i32) -> (i32, i32) {
    %c0_i32 = arith.constant 0 : i32
    %c0_i32_0 = arith.constant 0 : i32
    %c0_i32_1 = arith.constant 0 : i32
    return %c0_i32, %c0_i32_0 : i32, i32
  }
  func.func @transform_4(%arg0: i32) -> (i32, i32) {
    %c0_i32 = arith.constant 0 : i32
    %c0_i32_0 = arith.constant 0 : i32
    %c0_i32_1 = arith.constant 0 : i32
    return %c0_i32, %c0_i32_0 : i32, i32
  }
  func.func @transform_5(%arg0: i32) -> (i32, i32) {
    %c0_i32 = arith.constant 0 : i32
    %c0_i32_0 = arith.constant 0 : i32
    %c0_i32_1 = arith.constant 0 : i32
    return %c0_i32, %c0_i32_0 : i32, i32
  }
  func.func @transform_6(%arg0: i32) -> (i32, i32) {
    %c0_i32 = arith.constant 0 : i32
    %c0_i32_0 = arith.constant 0 : i32
    %c0_i32_1 = arith.constant 0 : i32
    return %c0_i32, %c0_i32_0 : i32, i32
  }
  func.func @transform_7(%arg0: i32) -> (i32, i32) {
    %c0_i32 = arith.constant 0 : i32
    %c0_i32_0 = arith.constant 0 : i32
    %c0_i32_1 = arith.constant 0 : i32
    return %c0_i32, %c0_i32_0 : i32, i32
  }
  func.func @transform_8(%arg0: i32) -> (i32, i32) {
    %c0_i32 = arith.constant 0 : i32
    %c0_i32_0 = arith.constant 0 : i32
    %c0_i32_1 = arith.constant 0 : i32
    return %c0_i32, %c0_i32_0 : i32, i32
  }
  func.func @transform_9(%arg0: i32) -> (i32, i32) {
    %c0_i32 = arith.constant 0 : i32
    %c0_i32_0 = arith.constant 0 : i32
    %c0_i32_1 = arith.constant 0 : i32
    return %c0_i32, %c0_i32_0 : i32, i32
  }
  func.func @transform_10(%arg0: i32) -> (i32, i32) {
    %c0_i32 = arith.constant 0 : i32
    %c0_i32_0 = arith.constant 0 : i32
    %c0_i32_1 = arith.constant 0 : i32
    return %c0_i32, %c0_i32_0 : i32, i32
  }
  func.func @transform_11(%arg0: i32) -> (i32, i32) {
    %c0_i32 = arith.constant 0 : i32
    %c0_i32_0 = arith.constant 0 : i32
    %c0_i32_1 = arith.constant 0 : i32
    return %c0_i32, %c0_i32_0 : i32, i32
  }
  func.func @transform_12(%arg0: i32) -> (i32, i32, i32) {
    %c0_i32 = arith.constant 0 : i32
    %c0_i32_0 = arith.constant 0 : i32
    %c0_i32_1 = arith.constant 0 : i32
    return %arg0, %c0_i32, %c0_i32_0 : i32, i32, i32
  }
}

</mosaic_0001>

<llo_original>
// kernel: tpu_custom_call.1
$region0: #{tpu_custom_call.1}
  #allocation0 [shape = 'u32[]', space=smem, size = 0x4, offset = 0x4, fixed_abs, tag = 'smem constant byte address 0x4 - core index']
  #allocation1 [shape = 'u32[144,128]{1,0:T(1,128)}', space=vmem, size = 0x12000, scoped, tag = 'internal scratch']
  %s0 = inlined_call_operand.vmem [shape: f32[4,8,16], index: 0, kind: input, shape index: {}]
  %s1 = inlined_call_operand.hbm [shape: f32[4,16], index: 1, kind: input, shape index: {}]
  %s2 = inlined_call_operand.vmem [shape: f32[16,16], index: 2, kind: input, shape index: {}]
  %s3 = inlined_call_operand.vmem [shape: f32[1,16], index: 3, kind: input, shape index: {}]
  %s4 = inlined_call_operand.hbm [shape: f32[16,32], index: 4, kind: input, shape index: {}]
  %s5 = inlined_call_operand.vmem [shape: f32[1,32], index: 5, kind: input, shape index: {}]
  %s6 = inlined_call_operand.hbm [shape: f32[16,16], index: 6, kind: input, shape index: {}]
  %s7 = inlined_call_operand.hbm [shape: f32[1,16], index: 7, kind: input, shape index: {}]
  %s8 = inlined_call_operand.hbm [shape: f32[16,32], index: 8, kind: input, shape index: {}]
  %s9 = inlined_call_operand.hbm [shape: f32[1,32], index: 9, kind: input, shape index: {}]
  %s10 = inlined_call_operand.vmem [shape: f32[32,16], index: 10, kind: input, shape index: {}]
  %s11 = inlined_call_operand.vmem [shape: f32[1,16], index: 11, kind: input, shape index: {}]
  %s12 = inlined_call_operand.hbm [shape: f32[4,4,16], index: 12, kind: output, shape index: {}]
  %s13 = sld [smem:[#allocation0]]
  $region105: #{tpu_custom_call.1} parent=0
    _
  %s15 = ssub.s32 1, %s13
  %s16 = scalar_select 0, %s15, %s13
  $region1: #{tpu_custom_call.1} parent=0
    #allocation2 [shape = 'u8[2048]{0}', space=vmem, size = 0x800, scoped, tag = 'input window, operand 1, single buffered']
    #allocation3 [shape = 's32[2]{0}', space=sflag, size = 0x8, scoped, tag = 'scoped memory for tpu_custom_call.1']
    #allocation4 [shape = 's32[2]{0}', space=sflag, size = 0x8, scoped, tag = 'scoped memory for tpu_custom_call.1']
    #allocation5 [shape = 'u8[8192]{0}', space=vmem, size = 0x2000, scoped, tag = 'input window, operand 4, single buffered']
    #allocation6 [shape = 's32[1]{0}', space=sflag, size = 0x4, scoped, tag = 'scoped memory for tpu_custom_call.1']
    #allocation7 [shape = 'u8[8192]{0}', space=vmem, size = 0x2000, scoped, tag = 'input window, operand 6, single buffered']
    #allocation8 [shape = 'u8[512]{0}', space=vmem, size = 0x400, scoped, tag = 'input window, operand 7, single buffered']
    #allocation9 [shape = 's32[1]{0}', space=sflag, size = 0x4, scoped, tag = 'scoped memory for tpu_custom_call.1']
    #allocation10 [shape = 'u8[8192]{0}', space=vmem, size = 0x2000, scoped, tag = 'input window, operand 8, single buffered']
    #allocation11 [shape = 'u8[512]{0}', space=vmem, size = 0x400, scoped, tag = 'input window, operand 9, single buffered']
    #allocation12 [shape = 's32[1]{0}', space=sflag, size = 0x4, scoped, tag = 'scoped memory for tpu_custom_call.1']
    #allocation13 [shape = 'u8[8192]{0}', space=vmem, size = 0x2000, scoped, tag = 'output window, operand 0']
    %17 = vsyncpa [#allocation3], 0
    %18 = vsyncpa [#allocation6], 0
    %19 = vsyncpa [#allocation9], 0
    %20 = vsyncpa [#allocation12], 0
    %21 = vsyncpa [#allocation4], 0
    %s22 = scalar_lea.sflag [#allocation4], 1
    %23 = vsyncpa %s22, 0
    loop: start=0, step=1, limit=4
    $region2: #{tpu_custom_call.1} parent=1 // loop_pre_header
      _
    $region3: #{tpu_custom_call.1} parent=1 // loop_header
      %s25 = sphi 0, %s29
      %p26 = scmp.ge.s32.totalorder %s25, 4
      %s35 = sphi 0, %s37
      %s38 = sphi 0, %s35
      %s39 = sphi 0, %s38
      %s55 = sphi 0, %s39
      %s59 = sphi 0, %s59
      %s61 = sphi 0, %s59
      %s62 = sphi 0, %s61
      %s76 = sphi 0, %s62
      %s80 = sphi 0, %s80
      %s82 = sphi 0, %s80
      %s83 = sphi 0, %s82
      %s97 = sphi 0, %s83
      %s101 = sphi 0, %s101
      %s103 = sphi 0, %s101
      %s104 = sphi 0, %s103
      %s118 = sphi 0, %s104
      %s122 = sphi 0, %s122
      %s124 = sphi 0, %s122
      %s125 = sphi 0, %s124
      %s139 = sphi 0, %s125
      %s143 = sphi 0, %s143
      %s145 = sphi 0, %s143
      %s146 = sphi 0, %s145
      %s160 = sphi 0, %s146
      %s164 = sphi 0, %s164
      %s166 = sphi 0, %s164
      %s167 = sphi 0, %s166
      %s181 = sphi 0, %s167
      %s185 = sphi 0, %s185
      %s187 = sphi 0, %s185
      %s188 = sphi 0, %s187
      %s202 = sphi 0, %s188
      %s206 = sphi 0, %s206
      %s208 = sphi 0, %s206
      %s209 = sphi 0, %s208
      %s223 = sphi 0, %s209
      %s227 = sphi 0, %s227
      %s229 = sphi 0, %s227
      %s230 = sphi 0, %s229
      %s244 = sphi 0, %s230
      %s248 = sphi 0, %s248
      %s250 = sphi 0, %s248
      %s251 = sphi 0, %s250
      %s265 = sphi 0, %s251
      %s269 = sphi 0, %s269
      %s271 = sphi 0, %s269
      %s272 = sphi 0, %s271
      %s286 = sphi 0, %s272
      %s292 = sphi 0, %s294
      %s295 = sphi 0, %s292
      %s296 = sphi 0, %s295
      %s312 = sphi 0, %s296
    $region4: #{tpu_custom_call.1} parent=1 // loop_header_branch
      %28 = sbr.rel (%p26) target = $region8
    $region5: #{tpu_custom_call.1} parent=1 // loop_body
      %s30 = ssub.s32 %s25, 1
      %s31 = ssub.s32 %s25, 2
      %s32 = sadd.s32 %s25, 1
      %s33 = ssub.s32 %s25, %s32
      %p34 = scmp.eq.s32.totalorder %s33, 0
      %s36 = sadd.s32 %s35, 1
      %s37 = scalar_select %p34, %s35, %s36
      %p40 = pneg %p34
      %p41 = scmp.eq.s32.totalorder %s25, 1
      %p42 = por %p40, %p41
      %p43 = scmp.ne.s32.totalorder %s35, %s38
      %p44 = scmp.eq.s32.totalorder %s25, 0
      %p45 = por %p43, %p44
      %p46 = scmp.ne.s32.totalorder %s35, %s38
      %p47 = scmp.eq.s32.totalorder %s30, 1
      %p48 = por %p46, %p47
      %p49 = scmp.ne.s32.totalorder %s38, %s39
      %p50 = scmp.eq.s32.totalorder %s30, 0
      %p51 = por %p49, %p50
      %p52 = scmp.ne.s32.totalorder %s38, %s39
      %p53 = scmp.eq.s32.totalorder %s31, 1
      %p54 = por %p52, %p53
      %p56 = scmp.ne.s32.totalorder %s39, %s55
      %p57 = scmp.eq.s32.totalorder %s31, 0
      %p58 = por %p56, %p57
      %s60 = sadd.s32 %s59, 1
      %p63 = scmp.eq.s32.totalorder %s25, 1
      %p64 = scmp.ne.s32.totalorder %s59, %s61
      %p65 = scmp.eq.s32.totalorder %s25, 0
      %p66 = por %p64, %p65
      %p67 = scmp.ne.s32.totalorder %s59, %s61
      %p68 = scmp.eq.s32.totalorder %s30, 1
      %p69 = por %p67, %p68
      %p70 = scmp.ne.s32.totalorder %s61, %s62
      %p71 = scmp.eq.s32.totalorder %s30, 0
      %p72 = por %p70, %p71
      %p73 = scmp.ne.s32.totalorder %s61, %s62
      %p74 = scmp.eq.s32.totalorder %s31, 1
      %p75 = por %p73, %p74
      %p77 = scmp.ne.s32.totalorder %s62, %s76
      %p78 = scmp.eq.s32.totalorder %s31, 0
      %p79 = por %p77, %p78
      %s81 = sadd.s32 %s80, 1
      %p84 = scmp.eq.s32.totalorder %s25, 1
      %p85 = scmp.ne.s32.totalorder %s80, %s82
      %p86 = scmp.eq.s32.totalorder %s25, 0
      %p87 = por %p85, %p86
      %p88 = scmp.ne.s32.totalorder %s80, %s82
      %p89 = scmp.eq.s32.totalorder %s30, 1
      %p90 = por %p88, %p89
      %p91 = scmp.ne.s32.totalorder %s82, %s83
      %p92 = scmp.eq.s32.totalorder %s30, 0
      %p93 = por %p91, %p92
      %p94 = scmp.ne.s32.totalorder %s82, %s83
      %p95 = scmp.eq.s32.totalorder %s31, 1
      %p96 = por %p94, %p95
      %p98 = scmp.ne.s32.totalorder %s83, %s97
      %p99 = scmp.eq.s32.totalorder %s31, 0
      %p100 = por %p98, %p99
      %s102 = sadd.s32 %s101, 1
      %p105 = scmp.eq.s32.totalorder %s25, 1
      %p106 = scmp.ne.s32.totalorder %s101, %s103
      %p107 = scmp.eq.s32.totalorder %s25, 0
      %p108 = por %p106, %p107
      %p109 = scmp.ne.s32.totalorder %s101, %s103
      %p110 = scmp.eq.s32.totalorder %s30, 1
      %p111 = por %p109, %p110
      %p112 = scmp.ne.s32.totalorder %s103, %s104
      %p113 = scmp.eq.s32.totalorder %s30, 0
      %p114 = por %p112, %p113
      %p115 = scmp.ne.s32.totalorder %s103, %s104
      %p116 = scmp.eq.s32.totalorder %s31, 1
      %p117 = por %p115, %p116
      %p119 = scmp.ne.s32.totalorder %s104, %s118
      %p120 = scmp.eq.s32.totalorder %s31, 0
      %p121 = por %p119, %p120
      %s123 = sadd.s32 %s122, 1
      %p126 = scmp.eq.s32.totalorder %s25, 1
      %p127 = scmp.ne.s32.totalorder %s122, %s124
      %p128 = scmp.eq.s32.totalorder %s25, 0
      %p129 = por %p127, %p128
      %p130 = scmp.ne.s32.totalorder %s122, %s124
      %p131 = scmp.eq.s32.totalorder %s30, 1
      %p132 = por %p130, %p131
      %p133 = scmp.ne.s32.totalorder %s124, %s125
      %p134 = scmp.eq.s32.totalorder %s30, 0
      %p135 = por %p133, %p134
      %p136 = scmp.ne.s32.totalorder %s124, %s125
      %p137 = scmp.eq.s32.totalorder %s31, 1
      %p138 = por %p136, %p137
      %p140 = scmp.ne.s32.totalorder %s125, %s139
      %p141 = scmp.eq.s32.totalorder %s31, 0
      %p142 = por %p140, %p141
      %s144 = sadd.s32 %s143, 1
      %p147 = scmp.eq.s32.totalorder %s25, 1
      %p148 = scmp.ne.s32.totalorder %s143, %s145
      %p149 = scmp.eq.s32.totalorder %s25, 0
      %p150 = por %p148, %p149
      %p151 = scmp.ne.s32.totalorder %s143, %s145
      %p152 = scmp.eq.s32.totalorder %s30, 1
      %p153 = por %p151, %p152
      %p154 = scmp.ne.s32.totalorder %s145, %s146
      %p155 = scmp.eq.s32.totalorder %s30, 0
      %p156 = por %p154, %p155
      %p157 = scmp.ne.s32.totalorder %s145, %s146
      %p158 = scmp.eq.s32.totalorder %s31, 1
      %p159 = por %p157, %p158
      %p161 = scmp.ne.s32.totalorder %s146, %s160
      %p162 = scmp.eq.s32.totalorder %s31, 0
      %p163 = por %p161, %p162
      %s165 = sadd.s32 %s164, 1
      %p168 = scmp.eq.s32.totalorder %s25, 1
      %p169 = scmp.ne.s32.totalorder %s164, %s166
      %p170 = scmp.eq.s32.totalorder %s25, 0
      %p171 = por %p169, %p170
      %p172 = scmp.ne.s32.totalorder %s164, %s166
      %p173 = scmp.eq.s32.totalorder %s30, 1
      %p174 = por %p172, %p173
      %p175 = scmp.ne.s32.totalorder %s166, %s167
      %p176 = scmp.eq.s32.totalorder %s30, 0
      %p177 = por %p175, %p176
      %p178 = scmp.ne.s32.totalorder %s166, %s167
      %p179 = scmp.eq.s32.totalorder %s31, 1
      %p180 = por %p178, %p179
      %p182 = scmp.ne.s32.totalorder %s167, %s181
      %p183 = scmp.eq.s32.totalorder %s31, 0
      %p184 = por %p182, %p183
      %s186 = sadd.s32 %s185, 1
      %p189 = scmp.eq.s32.totalorder %s25, 1
      %p190 = scmp.ne.s32.totalorder %s185, %s187
      %p191 = scmp.eq.s32.totalorder %s25, 0
      %p192 = por %p190, %p191
      %p193 = scmp.ne.s32.totalorder %s185, %s187
      %p194 = scmp.eq.s32.totalorder %s30, 1
      %p195 = por %p193, %p194
      %p196 = scmp.ne.s32.totalorder %s187, %s188
      %p197 = scmp.eq.s32.totalorder %s30, 0
      %p198 = por %p196, %p197
      %p199 = scmp.ne.s32.totalorder %s187, %s188
      %p200 = scmp.eq.s32.totalorder %s31, 1
      %p201 = por %p199, %p200
      %p203 = scmp.ne.s32.totalorder %s188, %s202
      %p204 = scmp.eq.s32.totalorder %s31, 0
      %p205 = por %p203, %p204
      %s207 = sadd.s32 %s206, 1
      %p210 = scmp.eq.s32.totalorder %s25, 1
      %p211 = scmp.ne.s32.totalorder %s206, %s208
      %p212 = scmp.eq.s32.totalorder %s25, 0
      %p213 = por %p211, %p212
      %p214 = scmp.ne.s32.totalorder %s206, %s208
      %p215 = scmp.eq.s32.totalorder %s30, 1
      %p216 = por %p214, %p215
      %p217 = scmp.ne.s32.totalorder %s208, %s209
      %p218 = scmp.eq.s32.totalorder %s30, 0
      %p219 = por %p217, %p218
      %p220 = scmp.ne.s32.totalorder %s208, %s209
      %p221 = scmp.eq.s32.totalorder %s31, 1
      %p222 = por %p220, %p221
      %p224 = scmp.ne.s32.totalorder %s209, %s223
      %p225 = scmp.eq.s32.totalorder %s31, 0
      %p226 = por %p224, %p225
      %s228 = sadd.s32 %s227, 1
      %p231 = scmp.eq.s32.totalorder %s25, 1
      %p232 = scmp.ne.s32.totalorder %s227, %s229
      %p233 = scmp.eq.s32.totalorder %s25, 0
      %p234 = por %p232, %p233
      %p235 = scmp.ne.s32.totalorder %s227, %s229
      %p236 = scmp.eq.s32.totalorder %s30, 1
      %p237 = por %p235, %p236
      %p238 = scmp.ne.s32.totalorder %s229, %s230
      %p239 = scmp.eq.s32.totalorder %s30, 0
      %p240 = por %p238, %p239
      %p241 = scmp.ne.s32.totalorder %s229, %s230
      %p242 = scmp.eq.s32.totalorder %s31, 1
      %p243 = por %p241, %p242
      %p245 = scmp.ne.s32.totalorder %s230, %s244
      %p246 = scmp.eq.s32.totalorder %s31, 0
      %p247 = por %p245, %p246
      %s249 = sadd.s32 %s248, 1
      %p252 = scmp.eq.s32.totalorder %s25, 1
      %p253 = scmp.ne.s32.totalorder %s248, %s250
      %p254 = scmp.eq.s32.totalorder %s25, 0
      %p255 = por %p253, %p254
      %p256 = scmp.ne.s32.totalorder %s248, %s250
      %p257 = scmp.eq.s32.totalorder %s30, 1
      %p258 = por %p256, %p257
      %p259 = scmp.ne.s32.totalorder %s250, %s251
      %p260 = scmp.eq.s32.totalorder %s30, 0
      %p261 = por %p259, %p260
      %p262 = scmp.ne.s32.totalorder %s250, %s251
      %p263 = scmp.eq.s32.totalorder %s31, 1
      %p264 = por %p262, %p263
      %p266 = scmp.ne.s32.totalorder %s251, %s265
      %p267 = scmp.eq.s32.totalorder %s31, 0
      %p268 = por %p266, %p267
      %s270 = sadd.s32 %s269, 1
      %p273 = scmp.eq.s32.totalorder %s25, 1
      %p274 = scmp.ne.s32.totalorder %s269, %s271
      %p275 = scmp.eq.s32.totalorder %s25, 0
      %p276 = por %p274, %p275
      %p277 = scmp.ne.s32.totalorder %s269, %s271
      %p278 = scmp.eq.s32.totalorder %s30, 1
      %p279 = por %p277, %p278
      %p280 = scmp.ne.s32.totalorder %s271, %s272
      %p281 = scmp.eq.s32.totalorder %s30, 0
      %p282 = por %p280, %p281
      %p283 = scmp.ne.s32.totalorder %s271, %s272
      %p284 = scmp.eq.s32.totalorder %s31, 1
      %p285 = por %p283, %p284
      %p287 = scmp.ne.s32.totalorder %s272, %s286
      %p288 = scmp.eq.s32.totalorder %s31, 0
      %p289 = por %p287, %p288
      %s290 = ssub.s32 %s25, %s32
      %p291 = scmp.eq.s32.totalorder %s290, 0
      %s293 = sadd.s32 %s292, 1
      %s294 = scalar_select %p291, %s292, %s293
      %p297 = pneg %p291
      %p298 = scmp.eq.s32.totalorder %s25, 1
      %p299 = por %p297, %p298
      %p300 = scmp.ne.s32.totalorder %s292, %s295
      %p301 = scmp.eq.s32.totalorder %s25, 0
      %p302 = por %p300, %p301
      %p303 = scmp.ne.s32.totalorder %s292, %s295
      %p304 = scmp.eq.s32.totalorder %s30, 1
      %p305 = por %p303, %p304
      %p306 = scmp.ne.s32.totalorder %s295, %s296
      %p307 = scmp.eq.s32.totalorder %s30, 0
      %p308 = por %p306, %p307
      %p309 = scmp.ne.s32.totalorder %s295, %s296
      %p310 = scmp.eq.s32.totalorder %s31, 1
      %p311 = por %p309, %p310
      %p313 = scmp.ne.s32.totalorder %s296, %s312
      %p314 = scmp.eq.s32.totalorder %s31, 0
      %p315 = por %p313, %p314
      %p316 = scmp.le.s32.totalorder 1, %s25
      %p317 = scmp.lt.s32.totalorder %s25, 3
      %p318 = pnand %p316, %p317
      %p319 = pneg %p318
      // Predicated region
      $region9: #{tpu_custom_call.1} parent=5 // pred_check
        _
      $region10: #{tpu_custom_call.1} parent=5 // pred_check_branch
        %321 = sbr.rel (%p318) target = $region12
      $region11: #{tpu_custom_call.1} parent=5 // pred_region
        %s322 = ssub.s32 %s25, 1
        // Predicated region
        $region13: #{tpu_custom_call.1} parent=11 // pred_check
          %p323 = pneg %p72
        $region14: #{tpu_custom_call.1} parent=11 // pred_check_branch
          %325 = sbr.rel (%p323) target = $region16
        $region15: #{tpu_custom_call.1} parent=11 // pred_region
          %s327 = ssub.s32 64, 64
          %328 = vsyncadd [#allocation3], %s327
          %s330 = sshll.u32 [#allocation2], 4
          %s331 = int_to_ptr.vmem [resolvable:$true] %s330
          %333 = dma.hbm_to_vmem [thread:$0]  %s1, 64, %s331, [#allocation3]
        $region16: #{tpu_custom_call.1} parent=11 // pred_fallthru
          _
        // Predicated region
        $region17: #{tpu_custom_call.1} parent=11 // pred_check
          %p334 = pneg %p93
        $region18: #{tpu_custom_call.1} parent=11 // pred_check_branch
          %336 = sbr.rel (%p334) target = $region20
        $region19: #{tpu_custom_call.1} parent=11 // pred_region
          _
        $region20: #{tpu_custom_call.1} parent=11 // pred_fallthru
          _
        // Predicated region
        $region21: #{tpu_custom_call.1} parent=11 // pred_check
          %p337 = pneg %p114
        $region22: #{tpu_custom_call.1} parent=11 // pred_check_branch
          %339 = sbr.rel (%p337) target = $region24
        $region23: #{tpu_custom_call.1} parent=11 // pred_region
          _
        $region24: #{tpu_custom_call.1} parent=11 // pred_fallthru
          _
        // Predicated region
        $region25: #{tpu_custom_call.1} parent=11 // pred_check
          %p340 = pneg %p135
        $region26: #{tpu_custom_call.1} parent=11 // pred_check_branch
          %342 = sbr.rel (%p340) target = $region28
        $region27: #{tpu_custom_call.1} parent=11 // pred_region
          %s344 = ssub.s32 256, 256
          %345 = vsyncadd [#allocation6], %s344
          %s346 = sshll.u32 [#allocation5], 4
          %s347 = int_to_ptr.vmem [resolvable:$true] %s346
          %352 = dma.hbm_to_vmem [thread:$0]  %s4, 256, %s347, [#allocation6], 128, 128, 8
        $region28: #{tpu_custom_call.1} parent=11 // pred_fallthru
          _
        // Predicated region
        $region29: #{tpu_custom_call.1} parent=11 // pred_check
          %p353 = pneg %p156
        $region30: #{tpu_custom_call.1} parent=11 // pred_check_branch
          %355 = sbr.rel (%p353) target = $region32
        $region31: #{tpu_custom_call.1} parent=11 // pred_region
          _
        $region32: #{tpu_custom_call.1} parent=11 // pred_fallthru
          _
        // Predicated region
        $region33: #{tpu_custom_call.1} parent=11 // pred_check
          %p356 = pneg %p177
        $region34: #{tpu_custom_call.1} parent=11 // pred_check_branch
          %358 = sbr.rel (%p356) target = $region36
        $region35: #{tpu_custom_call.1} parent=11 // pred_region
          %s360 = ssub.s32 256, 256
          %361 = vsyncadd [#allocation6], %s360
          %s362 = sshll.u32 [#allocation7], 4
          %s363 = int_to_ptr.vmem [resolvable:$true] %s362
          %368 = dma.hbm_to_vmem [thread:$0]  %s6, 256, %s363, [#allocation6], 128, 128, 8
        $region36: #{tpu_custom_call.1} parent=11 // pred_fallthru
          _
        // Predicated region
        $region37: #{tpu_custom_call.1} parent=11 // pred_check
          %p369 = pneg %p198
        $region38: #{tpu_custom_call.1} parent=11 // pred_check_branch
          %371 = sbr.rel (%p369) target = $region40
        $region39: #{tpu_custom_call.1} parent=11 // pred_region
          %s373 = ssub.s32 16, 16
          %374 = vsyncadd [#allocation9], %s373
          %s376 = sshll.u32 [#allocation8], 4
          %s377 = int_to_ptr.vmem [resolvable:$true] %s376
          %379 = dma.hbm_to_vmem [thread:$0]  %s7, 16, %s377, [#allocation9]
        $region40: #{tpu_custom_call.1} parent=11 // pred_fallthru
          _
        // Predicated region
        $region41: #{tpu_custom_call.1} parent=11 // pred_check
          %p380 = pneg %p219
        $region42: #{tpu_custom_call.1} parent=11 // pred_check_branch
          %382 = sbr.rel (%p380) target = $region44
        $region43: #{tpu_custom_call.1} parent=11 // pred_region
          %s384 = ssub.s32 256, 256
          %385 = vsyncadd [#allocation9], %s384
          %s386 = sshll.u32 [#allocation10], 4
          %s387 = int_to_ptr.vmem [resolvable:$true] %s386
          %392 = dma.hbm_to_vmem [thread:$0]  %s8, 256, %s387, [#allocation9], 128, 128, 8
        $region44: #{tpu_custom_call.1} parent=11 // pred_fallthru
          _
        // Predicated region
        $region45: #{tpu_custom_call.1} parent=11 // pred_check
          %p393 = pneg %p240
        $region46: #{tpu_custom_call.1} parent=11 // pred_check_branch
          %395 = sbr.rel (%p393) target = $region48
        $region47: #{tpu_custom_call.1} parent=11 // pred_region
          %s397 = ssub.s32 16, 16
          %398 = vsyncadd [#allocation12], %s397
          %s400 = sshll.u32 [#allocation11], 4
          %s401 = int_to_ptr.vmem [resolvable:$true] %s400
          %403 = dma.hbm_to_vmem [thread:$0]  %s9, 16, %s401, [#allocation12]
        $region48: #{tpu_custom_call.1} parent=11 // pred_fallthru
          _
        // Predicated region
        $region49: #{tpu_custom_call.1} parent=11 // pred_check
          %p404 = pneg %p261
        $region50: #{tpu_custom_call.1} parent=11 // pred_check_branch
          %406 = sbr.rel (%p404) target = $region52
        $region51: #{tpu_custom_call.1} parent=11 // pred_region
          _
        $region52: #{tpu_custom_call.1} parent=11 // pred_fallthru
          _
        // Predicated region
        $region53: #{tpu_custom_call.1} parent=11 // pred_check
          %p407 = pneg %p282
        $region54: #{tpu_custom_call.1} parent=11 // pred_check_branch
          %409 = sbr.rel (%p407) target = $region56
        $region55: #{tpu_custom_call.1} parent=11 // pred_region
          _
        $region56: #{tpu_custom_call.1} parent=11 // pred_fallthru
          _
      $region12: #{tpu_custom_call.1} parent=5 // pred_fallthru
        _
      %p410 = scmp.lt.s32.totalorder %s25, 2
      // Predicated region
      $region57: #{tpu_custom_call.1} parent=5 // pred_check
        %p411 = pneg %p410
      $region58: #{tpu_custom_call.1} parent=5 // pred_check_branch
        %413 = sbr.rel (%p411) target = $region60
      $region59: #{tpu_custom_call.1} parent=5 // pred_region
        // Predicated region
        $region61: #{tpu_custom_call.1} parent=59 // pred_check
          %p414 = pneg %p45
        $region62: #{tpu_custom_call.1} parent=59 // pred_check_branch
          %416 = sbr.rel (%p414) target = $region64
        $region63: #{tpu_custom_call.1} parent=59 // pred_region
          %s417 = smul.u32 2, %s25
          %p418 = scmp.lt.s32.totalorder %s417, 3
          %s419 = scalar_select %p418, %s417, 3
          %s420 = smul.addr %s419, 8
          %s421 = scalar_lea.vmem %s0, %s420
          %s422 = smul.u32 2, %s25
        $region64: #{tpu_custom_call.1} parent=59 // pred_fallthru
          _
      $region60: #{tpu_custom_call.1} parent=5 // pred_fallthru
        _
      %p423 = scmp.le.s32.totalorder 1, %s25
      %p424 = scmp.lt.s32.totalorder %s25, 3
      %p425 = pnand %p423, %p424
      %p426 = pneg %p425
      // Predicated region
      $region65: #{tpu_custom_call.1} parent=5 // pred_check
        _
      $region66: #{tpu_custom_call.1} parent=5 // pred_check_branch
        %428 = sbr.rel (%p425) target = $region68
      $region67: #{tpu_custom_call.1} parent=5 // pred_region
        %s429 = ssub.s32 %s25, 1
        // Predicated region
        $region69: #{tpu_custom_call.1} parent=67 // pred_check
          %p430 = pneg %p72
        $region70: #{tpu_custom_call.1} parent=67 // pred_check_branch
          %432 = sbr.rel (%p430) target = $region72
        $region71: #{tpu_custom_call.1} parent=67 // pred_region
          %433 = dma.done [#allocation3], 64
        $region72: #{tpu_custom_call.1} parent=67 // pred_fallthru
          _
        // Predicated region
        $region73: #{tpu_custom_call.1} parent=67 // pred_check
          %p434 = pneg %p135
        $region74: #{tpu_custom_call.1} parent=67 // pred_check_branch
          %436 = sbr.rel (%p434) target = $region76
        $region75: #{tpu_custom_call.1} parent=67 // pred_region
          %437 = dma.done [#allocation6], 256
        $region76: #{tpu_custom_call.1} parent=67 // pred_fallthru
          _
        // Predicated region
        $region77: #{tpu_custom_call.1} parent=67 // pred_check
          %p438 = pneg %p177
        $region78: #{tpu_custom_call.1} parent=67 // pred_check_branch
          %440 = sbr.rel (%p438) target = $region80
        $region79: #{tpu_custom_call.1} parent=67 // pred_region
          %441 = dma.done [#allocation6], 256
        $region80: #{tpu_custom_call.1} parent=67 // pred_fallthru
          _
        // Predicated region
        $region81: #{tpu_custom_call.1} parent=67 // pred_check
          %p442 = pneg %p198
        $region82: #{tpu_custom_call.1} parent=67 // pred_check_branch
          %444 = sbr.rel (%p442) target = $region84
        $region83: #{tpu_custom_call.1} parent=67 // pred_region
          %445 = dma.done [#allocation9], 16
        $region84: #{tpu_custom_call.1} parent=67 // pred_fallthru
          _
        // Predicated region
        $region85: #{tpu_custom_call.1} parent=67 // pred_check
          %p446 = pneg %p219
        $region86: #{tpu_custom_call.1} parent=67 // pred_check_branch
          %448 = sbr.rel (%p446) target = $region88
        $region87: #{tpu_custom_call.1} parent=67 // pred_region
          %449 = dma.done [#allocation9], 256
        $region88: #{tpu_custom_call.1} parent=67 // pred_fallthru
          _
        // Predicated region
        $region89: #{tpu_custom_call.1} parent=67 // pred_check
          %p450 = pneg %p240
        $region90: #{tpu_custom_call.1} parent=67 // pred_check_branch
          %452 = sbr.rel (%p450) target = $region92
        $region91: #{tpu_custom_call.1} parent=67 // pred_region
          %453 = dma.done [#allocation12], 16
        $region92: #{tpu_custom_call.1} parent=67 // pred_fallthru
          _
        %s454 = smul.u32 2, %s30
        %p455 = scmp.lt.s32.totalorder %s454, 3
        %s456 = scalar_select %p455, %s454, 3
        %s457 = smul.addr %s456, 8
        %s458 = scalar_lea.vmem %s0, %s457
        %p459 = pneg %p51
        %p460 = pneg %p48
        %p461 = pneg %p72
        %p462 = pneg %p69
        %p463 = pneg %p93
        %p464 = pneg %p90
        %p465 = pneg %p114
        %p466 = pneg %p111
        %p467 = pneg %p135
        %p468 = pneg %p132
        %p469 = pneg %p156
        %p470 = pneg %p153
        %p471 = pneg %p177
        %p472 = pneg %p174
        %p473 = pneg %p198
        %p474 = pneg %p195
        %p475 = pneg %p219
        %p476 = pneg %p216
        %p477 = pneg %p240
        %p478 = pneg %p237
        %p479 = pneg %p261
        %p480 = pneg %p258
        %p481 = pneg %p282
        %p482 = pneg %p279
        %p483 = pneg %p308
        %p484 = pneg %p305
        %s485 = sand.u32 %s295, 1
        %s486 = scalar_lea.sflag [#allocation4], %s485
        %s487 = sand.u32 %s295, 1
        %s488 = smul.addr %s487, 8
        %s489 = scalar_lea.vmem [#allocation13], %s488
        %s490 = smul.u32 2, %s30
        %p491 = scmp.lt.s32.totalorder %s490, 3
        %s492 = scalar_select %p491, %s490, 3
        %s493 = smul.addr %s492, 8
        %s494 = scalar_lea.vmem %s0, %s493
        %s495 = smul.u32 2, %s30
        %s496 = smul.u32 2, %s30
        %v497 = vld [vmem:[%s494] sm:$0xff]
        %v498 = vld [vmem:[%s494 + $0x8] sm:$0xff]
        %v499 = vld [vmem:[#allocation5] sm:$0xff]
        %v500 = vld [vmem:[#allocation5 + $0x8] sm:$0xff]
        %v501 = vld [vmem:[%s5] sm:$0x1]
        %v503 = vlaneseq
        %v504 = vshrl.u32 %v503, 7
        %v505 = vsub.s32 0, %v504
        %v506 = vrot.slane %v501, %v505
        %vm508 = vcmask 130048
        %v510 = vsel %vm508, %v497, 0
        %v513 = vsel %vm508, %v498, 0
        %515 = vmatprep.subr.mxu0 0.0
        %516 = vmatpush1.msra.mxu0 0.0
        %517 = vmatprep.subr.mxu0 0.0
        %518 = vmatpush1.msra.mxu0 0.0
        %519 = vmatprep.subr.mxu0 0.0
        %520 = vmatpush1.msra.mxu0 0.0
        %521 = vmatprep.subr.mxu0 0.0
        %522 = vmatpush1.msra.mxu0 0.0
        %523 = vmatprep.subr.mxu0 0.0
        %524 = vmatpush1.msra.mxu0 0.0
        %525 = vmatprep.subr.mxu0 0.0
        %526 = vmatpush1.msra.mxu0 0.0
        %527 = vmatprep.subr.mxu0 0.0
        %528 = vmatpush1.msra.mxu0 0.0
        %529 = vmatprep.subr.mxu0 0.0
        %530 = vmatpush1.msra.mxu0 0.0
        %531 = vmatprep.subr.mxu0 0.0
        %532 = vmatpush1.msra.mxu0 0.0
        %533 = vmatprep.subr.mxu0 0.0
        %534 = vmatpush1.msra.mxu0 0.0
        %535 = vmatprep.subr.mxu0 0.0
        %536 = vmatpush1.msra.mxu0 0.0
        %537 = vmatprep.subr.mxu0 0.0
        %538 = vmatpush1.msra.mxu0 0.0
        %539 = vmatprep.subr.mxu0 0.0
        %540 = vmatpush1.msra.mxu0 0.0
        %541 = vmatprep.subr.mxu0 0.0
        %542 = vmatpush1.msra.mxu0 0.0
        %543 = vmatprep.subr.mxu0 0.0
        %544 = vmatpush1.msra.mxu0 %v500
        %545 = vmatprep.subr.mxu0 0.0
        %546 = vmatpush1.msra.mxu0 %v499
        %547 = vmatprep.subr.mxu0 0.0
        %548 = vmatpush2.msra.mxu0 0.0
        %549 = vmatprep.subr.mxu0 0.0
        %550 = vmatpush2.msra.mxu0 0.0
        %551 = vmatprep.subr.mxu0 0.0
        %552 = vmatpush2.msra.mxu0 0.0
        %553 = vmatprep.subr.mxu0 0.0
        %554 = vmatpush2.msra.mxu0 0.0
        %555 = vmatprep.subr.mxu0 0.0
        %556 = vmatpush2.msra.mxu0 0.0
        %557 = vmatprep.subr.mxu0 0.0
        %558 = vmatpush2.msra.mxu0 0.0
        %559 = vmatprep.subr.mxu0 0.0
        %560 = vmatpush2.msra.mxu0 0.0
        %561 = vmatprep.subr.mxu0 0.0
        %562 = vmatpush2.msra.mxu0 0.0
        %563 = vmatprep.subr.mxu0 0.0
        %564 = vmatpush2.msra.mxu0 0.0
        %565 = vmatprep.subr.mxu0 0.0
        %566 = vmatpush2.msra.mxu0 0.0
        %567 = vmatprep.subr.mxu0 0.0
        %568 = vmatpush2.msra.mxu0 0.0
        %569 = vmatprep.subr.mxu0 0.0
        %570 = vmatpush2.msra.mxu0 0.0
        %571 = vmatprep.subr.mxu0 0.0
        %572 = vmatpush2.msra.mxu0 0.0
        %573 = vmatprep.subr.mxu0 0.0
        %574 = vmatpush2.msra.mxu0 0.0
        %575 = vmatprep.subr.mxu0 0.0
        %576 = vmatpush2.msra.mxu0 0.0
        %577 = vmatprep.subr.mxu0 0.0
        %578 = vmatpush2.msra.mxu0 0.0
        %579 = vmatprep.mubr.f32.mxu0 0.0
        %580 = vmatmul.mubr.f32.gmra.mxu0 %v510
        %v581 = vpop.f32.mrf.mxu0
        %v582 = vadd.f32 %v506, %v581
        %v583 = vpop.f32.mrf.mxu0
        %584 = vmatprep.mubr.f32.mxu0 0.0
        %585 = vmatmul.mubr.f32.gmra.mxu0 %v513
        %v586 = vpop.f32.mrf.mxu0
        %v587 = vadd.f32 %v506, %v586
        %v588 = vpop.f32.mrf.mxu0
        %589 = vdwg.mxu0
        %v590 = vld [vmem:[#allocation2] sm:$0xf]
        %v591 = vld [vmem:[%s2] sm:$0xff]
        %v592 = vld [vmem:[%s2 + $0x8] sm:$0xff]
        %v593 = vld [vmem:[%s3] sm:$0x1]
        %v595 = vlaneseq
        %v596 = vshrl.u32 %v595, 7
        %v597 = vsub.s32 0, %v596
        %v598 = vrot.slane %v593, %v597
        %v601 = vsel %vm508, %v590, 0
        %603 = vmatprep.subr.mxu0 0.0
        %604 = vmatpush1.msra.mxu0 0.0
        %605 = vmatprep.subr.mxu0 0.0
        %606 = vmatpush1.msra.mxu0 0.0
        %607 = vmatprep.subr.mxu0 0.0
        %608 = vmatpush1.msra.mxu0 0.0
        %609 = vmatprep.subr.mxu0 0.0
        %610 = vmatpush1.msra.mxu0 0.0
        %611 = vmatprep.subr.mxu0 0.0
        %612 = vmatpush1.msra.mxu0 0.0
        %613 = vmatprep.subr.mxu0 0.0
        %614 = vmatpush1.msra.mxu0 0.0
        %615 = vmatprep.subr.mxu0 0.0
        %616 = vmatpush1.msra.mxu0 0.0
        %617 = vmatprep.subr.mxu0 0.0
        %618 = vmatpush1.msra.mxu0 0.0
        %619 = vmatprep.subr.mxu0 0.0
        %620 = vmatpush1.msra.mxu0 0.0
        %621 = vmatprep.subr.mxu0 0.0
        %622 = vmatpush1.msra.mxu0 0.0
        %623 = vmatprep.subr.mxu0 0.0
        %624 = vmatpush1.msra.mxu0 0.0
        %625 = vmatprep.subr.mxu0 0.0
        %626 = vmatpush1.msra.mxu0 0.0
        %627 = vmatprep.subr.mxu0 0.0
        %628 = vmatpush1.msra.mxu0 0.0
        %629 = vmatprep.subr.mxu0 0.0
        %630 = vmatpush1.msra.mxu0 0.0
        %631 = vmatprep.subr.mxu0 0.0
        %632 = vmatpush1.msra.mxu0 %v592
        %633 = vmatprep.subr.mxu0 0.0
        %634 = vmatpush1.msra.mxu0 %v591
        %635 = vmatprep.subr.mxu0 0.0
        %636 = vmatpush2.msra.mxu0 0.0
        %637 = vmatprep.subr.mxu0 0.0
        %638 = vmatpush2.msra.mxu0 0.0
        %639 = vmatprep.subr.mxu0 0.0
        %640 = vmatpush2.msra.mxu0 0.0
        %641 = vmatprep.subr.mxu0 0.0
        %642 = vmatpush2.msra.mxu0 0.0
        %643 = vmatprep.subr.mxu0 0.0
        %644 = vmatpush2.msra.mxu0 0.0
        %645 = vmatprep.subr.mxu0 0.0
        %646 = vmatpush2.msra.mxu0 0.0
        %647 = vmatprep.subr.mxu0 0.0
        %648 = vmatpush2.msra.mxu0 0.0
        %649 = vmatprep.subr.mxu0 0.0
        %650 = vmatpush2.msra.mxu0 0.0
        %651 = vmatprep.subr.mxu0 0.0
        %652 = vmatpush2.msra.mxu0 0.0
        %653 = vmatprep.subr.mxu0 0.0
        %654 = vmatpush2.msra.mxu0 0.0
        %655 = vmatprep.subr.mxu0 0.0
        %656 = vmatpush2.msra.mxu0 0.0
        %657 = vmatprep.subr.mxu0 0.0
        %658 = vmatpush2.msra.mxu0 0.0
        %659 = vmatprep.subr.mxu0 0.0
        %660 = vmatpush2.msra.mxu0 0.0
        %661 = vmatprep.subr.mxu0 0.0
        %662 = vmatpush2.msra.mxu0 0.0
        %663 = vmatprep.subr.mxu0 0.0
        %664 = vmatpush2.msra.mxu0 0.0
        %665 = vmatprep.subr.mxu0 0.0
        %666 = vmatpush2.msra.mxu0 0.0
        %667 = vmatprep.mubr.f32.mxu0 0.0
        %668 = vmatmul.mubr.f32.gmra.mxu0 %v601
        %v669 = vpop.f32.mrf.mxu0
        %v670 = vadd.f32 %v598, %v669
        %v671 = vpop.f32.mrf.mxu0
        %672 = vdwg.mxu0
        %v673 = vmul.f32 %v670, 0.25
        %v674 = vld [vmem:[#allocation7] sm:$0xff]
        %v675 = vld [vmem:[#allocation7 + $0x8] sm:$0xff]
        %vm676 = vcmask 31744
        %v678 = vsel %vm676, %v673, 0
        %v681 = vsel %vm676, %v582, 0
        %683 = vmatprep.subr.mxu0 0.0
        %684 = vmatpush1.xpose.msra.mxu0 0.0
        %685 = vmatprep.subr.mxu0 0.0
        %686 = vmatpush1.xpose.msra.mxu0 0.0
        %687 = vmatprep.subr.mxu0 0.0
        %688 = vmatpush1.xpose.msra.mxu0 0.0
        %689 = vmatprep.subr.mxu0 0.0
        %690 = vmatpush1.xpose.msra.mxu0 0.0
        %691 = vmatprep.subr.mxu0 0.0
        %692 = vmatpush1.xpose.msra.mxu0 0.0
        %693 = vmatprep.subr.mxu0 0.0
        %694 = vmatpush1.xpose.msra.mxu0 0.0
        %695 = vmatprep.subr.mxu0 0.0
        %696 = vmatpush1.xpose.msra.mxu0 0.0
        %697 = vmatprep.subr.mxu0 0.0
        %698 = vmatpush1.xpose.msra.mxu0 0.0
        %699 = vmatprep.subr.mxu0 0.0
        %700 = vmatpush1.xpose.msra.mxu0 0.0
        %701 = vmatprep.subr.mxu0 0.0
        %702 = vmatpush1.xpose.msra.mxu0 0.0
        %703 = vmatprep.subr.mxu0 0.0
        %704 = vmatpush1.xpose.msra.mxu0 0.0
        %705 = vmatprep.subr.mxu0 0.0
        %706 = vmatpush1.xpose.msra.mxu0 0.0
        %707 = vmatprep.subr.mxu0 0.0
        %708 = vmatpush1.xpose.msra.mxu0 0.0
        %709 = vmatprep.subr.mxu0 0.0
        %710 = vmatpush1.xpose.msra.mxu0 0.0
        %711 = vmatprep.subr.mxu0 0.0
        %712 = vmatpush1.xpose.msra.mxu0 0.0
        %713 = vmatprep.subr.mxu0 0.0
        %714 = vmatpush1.xpose.msra.mxu0 %v681
        %715 = vmatprep.subr.mxu0 0.0
        %716 = vmatpush2.xpose.msra.mxu0 0.0
        %717 = vmatprep.subr.mxu0 0.0
        %718 = vmatpush2.xpose.msra.mxu0 0.0
        %719 = vmatprep.subr.mxu0 0.0
        %720 = vmatpush2.xpose.msra.mxu0 0.0
        %721 = vmatprep.subr.mxu0 0.0
        %722 = vmatpush2.xpose.msra.mxu0 0.0
        %723 = vmatprep.subr.mxu0 0.0
        %724 = vmatpush2.xpose.msra.mxu0 0.0
        %725 = vmatprep.subr.mxu0 0.0
        %726 = vmatpush2.xpose.msra.mxu0 0.0
        %727 = vmatprep.subr.mxu0 0.0
        %728 = vmatpush2.xpose.msra.mxu0 0.0
        %729 = vmatprep.subr.mxu0 0.0
        %730 = vmatpush2.xpose.msra.mxu0 0.0
        %731 = vmatprep.subr.mxu0 0.0
        %732 = vmatpush2.xpose.msra.mxu0 0.0
        %733 = vmatprep.subr.mxu0 0.0
        %734 = vmatpush2.xpose.msra.mxu0 0.0
        %735 = vmatprep.subr.mxu0 0.0
        %736 = vmatpush2.xpose.msra.mxu0 0.0
        %737 = vmatprep.subr.mxu0 0.0
        %738 = vmatpush2.xpose.msra.mxu0 0.0
        %739 = vmatprep.subr.mxu0 0.0
        %740 = vmatpush2.xpose.msra.mxu0 0.0
        %741 = vmatprep.subr.mxu0 0.0
        %742 = vmatpush2.xpose.msra.mxu0 0.0
        %743 = vmatprep.subr.mxu0 0.0
        %744 = vmatpush2.xpose.msra.mxu0 0.0
        %745 = vmatprep.subr.mxu0 0.0
        %746 = vmatpush2.xpose.msra.mxu0 0.0
        %747 = vmatprep.mubr.f32.mxu0 0.0
        %748 = vmatmul.mubr.f32.gmra.mxu0 %v678
        %v749 = vpop.f32.mrf.mxu0
        %v750 = vadd.f32 0.0, %v749
        %v751 = vpop.f32.mrf.mxu0
        %752 = vdwg.mxu0
        %v754 = vsel %vm676, %v587, 0
        %756 = vmatprep.subr.mxu0 0.0
        %757 = vmatpush1.xpose.msra.mxu0 0.0
        %758 = vmatprep.subr.mxu0 0.0
        %759 = vmatpush1.xpose.msra.mxu0 0.0
        %760 = vmatprep.subr.mxu0 0.0
        %761 = vmatpush1.xpose.msra.mxu0 0.0
        %762 = vmatprep.subr.mxu0 0.0
        %763 = vmatpush1.xpose.msra.mxu0 0.0
        %764 = vmatprep.subr.mxu0 0.0
        %765 = vmatpush1.xpose.msra.mxu0 0.0
        %766 = vmatprep.subr.mxu0 0.0
        %767 = vmatpush1.xpose.msra.mxu0 0.0
        %768 = vmatprep.subr.mxu0 0.0
        %769 = vmatpush1.xpose.msra.mxu0 0.0
        %770 = vmatprep.subr.mxu0 0.0
        %771 = vmatpush1.xpose.msra.mxu0 0.0
        %772 = vmatprep.subr.mxu0 0.0
        %773 = vmatpush1.xpose.msra.mxu0 0.0
        %774 = vmatprep.subr.mxu0 0.0
        %775 = vmatpush1.xpose.msra.mxu0 0.0
        %776 = vmatprep.subr.mxu0 0.0
        %777 = vmatpush1.xpose.msra.mxu0 0.0
        %778 = vmatprep.subr.mxu0 0.0
        %779 = vmatpush1.xpose.msra.mxu0 0.0
        %780 = vmatprep.subr.mxu0 0.0
        %781 = vmatpush1.xpose.msra.mxu0 0.0
        %782 = vmatprep.subr.mxu0 0.0
        %783 = vmatpush1.xpose.msra.mxu0 0.0
        %784 = vmatprep.subr.mxu0 0.0
        %785 = vmatpush1.xpose.msra.mxu0 0.0
        %786 = vmatprep.subr.mxu0 0.0
        %787 = vmatpush1.xpose.msra.mxu0 %v754
        %788 = vmatprep.subr.mxu0 0.0
        %789 = vmatpush2.xpose.msra.mxu0 0.0
        %790 = vmatprep.subr.mxu0 0.0
        %791 = vmatpush2.xpose.msra.mxu0 0.0
        %792 = vmatprep.subr.mxu0 0.0
        %793 = vmatpush2.xpose.msra.mxu0 0.0
        %794 = vmatprep.subr.mxu0 0.0
        %795 = vmatpush2.xpose.msra.mxu0 0.0
        %796 = vmatprep.subr.mxu0 0.0
        %797 = vmatpush2.xpose.msra.mxu0 0.0
        %798 = vmatprep.subr.mxu0 0.0
        %799 = vmatpush2.xpose.msra.mxu0 0.0
        %800 = vmatprep.subr.mxu0 0.0
        %801 = vmatpush2.xpose.msra.mxu0 0.0
        %802 = vmatprep.subr.mxu0 0.0
        %803 = vmatpush2.xpose.msra.mxu0 0.0
        %804 = vmatprep.subr.mxu0 0.0
        %805 = vmatpush2.xpose.msra.mxu0 0.0
        %806 = vmatprep.subr.mxu0 0.0
        %807 = vmatpush2.xpose.msra.mxu0 0.0
        %808 = vmatprep.subr.mxu0 0.0
        %809 = vmatpush2.xpose.msra.mxu0 0.0
        %810 = vmatprep.subr.mxu0 0.0
        %811 = vmatpush2.xpose.msra.mxu0 0.0
        %812 = vmatprep.subr.mxu0 0.0
        %813 = vmatpush2.xpose.msra.mxu0 0.0
        %814 = vmatprep.subr.mxu0 0.0
        %815 = vmatpush2.xpose.msra.mxu0 0.0
        %816 = vmatprep.subr.mxu0 0.0
        %817 = vmatpush2.xpose.msra.mxu0 0.0
        %818 = vmatprep.subr.mxu0 0.0
        %819 = vmatpush2.xpose.msra.mxu0 0.0
        %820 = vmatprep.mubr.f32.mxu0 0.0
        %821 = vmatmul.mubr.f32.gmra.mxu0 %v678
        %v822 = vpop.f32.mrf.mxu0
        %v823 = vadd.f32 0.0, %v822
        %v824 = vpop.f32.mrf.mxu0
        %825 = vdwg.mxu0
        %vm826 = vcmask 60416
        %v827 = vsel %vm826, %v750, -inf
        %828 = vmax.xlane.f32.xlu0 %v827
        %v829 = vpop.xlane.xlu0 %828
        %v830 = vsel %vm826, %v823, -inf
        %831 = vmax.xlane.f32.xlu0 %v830
        %v832 = vpop.xlane.xlu0 %831
        %v833 = vsub.f32 %v750, %v829
        %v834 = vsub.f32 %v823, %v832
        %v835 = vmul.f32 %v833, 1.442695
        %v836 = vpow.pop %v835
        %v837 = vmul.f32 %v834, 1.442695
        %v838 = vpow.pop %v837
        %v839 = vsel %vm826, %v836, 0.0
        %840 = vadd.xlane.f32.xlu0 %v839
        %v841 = vpop.xlane.xlu0 %840
        %v842 = vsel %vm826, %v838, 0.0
        %843 = vadd.xlane.f32.xlu0 %v842
        %v844 = vpop.xlane.xlu0 %843
        %v845 = vrcp.pop %v841
        %v846 = vmul.f32 %v836, %v845
        %v847 = vrcp.pop %v844
        %v848 = vmul.f32 %v838, %v847
        %849 = vrot.lane.b32.xlu0 %v582, 112
        %v850 = vpop.permute.xlu0 %849
        %vm852 = vcmask 64512
        %v854 = vsel %vm852, %v846, 0
        %856 = vmatprep.subr.mxu0 0.0
        %857 = vmatpush1.msra.mxu0 0.0
        %858 = vmatprep.subr.mxu0 0.0
        %859 = vmatpush1.msra.mxu0 0.0
        %860 = vmatprep.subr.mxu0 0.0
        %861 = vmatpush1.msra.mxu0 0.0
        %862 = vmatprep.subr.mxu0 0.0
        %863 = vmatpush1.msra.mxu0 0.0
        %864 = vmatprep.subr.mxu0 0.0
        %865 = vmatpush1.msra.mxu0 0.0
        %866 = vmatprep.subr.mxu0 0.0
        %867 = vmatpush1.msra.mxu0 0.0
        %868 = vmatprep.subr.mxu0 0.0
        %869 = vmatpush1.msra.mxu0 0.0
        %870 = vmatprep.subr.mxu0 0.0
        %871 = vmatpush1.msra.mxu0 0.0
        %872 = vmatprep.subr.mxu0 0.0
        %873 = vmatpush1.msra.mxu0 0.0
        %874 = vmatprep.subr.mxu0 0.0
        %875 = vmatpush1.msra.mxu0 0.0
        %876 = vmatprep.subr.mxu0 0.0
        %877 = vmatpush1.msra.mxu0 0.0
        %878 = vmatprep.subr.mxu0 0.0
        %879 = vmatpush1.msra.mxu0 0.0
        %880 = vmatprep.subr.mxu0 0.0
        %881 = vmatpush1.msra.mxu0 0.0
        %882 = vmatprep.subr.mxu0 0.0
        %883 = vmatpush1.msra.mxu0 0.0
        %884 = vmatprep.subr.mxu0 0.0
        %885 = vmatpush1.msra.mxu0 0.0
        %886 = vmatprep.subr.mxu0 0.0
        %887 = vmatpush1.msra.mxu0 %v850
        %888 = vmatprep.subr.mxu0 0.0
        %889 = vmatpush2.msra.mxu0 0.0
        %890 = vmatprep.subr.mxu0 0.0
        %891 = vmatpush2.msra.mxu0 0.0
        %892 = vmatprep.subr.mxu0 0.0
        %893 = vmatpush2.msra.mxu0 0.0
        %894 = vmatprep.subr.mxu0 0.0
        %895 = vmatpush2.msra.mxu0 0.0
        %896 = vmatprep.subr.mxu0 0.0
        %897 = vmatpush2.msra.mxu0 0.0
        %898 = vmatprep.subr.mxu0 0.0
        %899 = vmatpush2.msra.mxu0 0.0
        %900 = vmatprep.subr.mxu0 0.0
        %901 = vmatpush2.msra.mxu0 0.0
        %902 = vmatprep.subr.mxu0 0.0
        %903 = vmatpush2.msra.mxu0 0.0
        %904 = vmatprep.subr.mxu0 0.0
        %905 = vmatpush2.msra.mxu0 0.0
        %906 = vmatprep.subr.mxu0 0.0
        %907 = vmatpush2.msra.mxu0 0.0
        %908 = vmatprep.subr.mxu0 0.0
        %909 = vmatpush2.msra.mxu0 0.0
        %910 = vmatprep.subr.mxu0 0.0
        %911 = vmatpush2.msra.mxu0 0.0
        %912 = vmatprep.subr.mxu0 0.0
        %913 = vmatpush2.msra.mxu0 0.0
        %914 = vmatprep.subr.mxu0 0.0
        %915 = vmatpush2.msra.mxu0 0.0
        %916 = vmatprep.subr.mxu0 0.0
        %917 = vmatpush2.msra.mxu0 0.0
        %918 = vmatprep.subr.mxu0 0.0
        %919 = vmatpush2.msra.mxu0 0.0
        %920 = vmatprep.mubr.f32.mxu0 0.0
        %921 = vmatmul.mubr.f32.gmra.mxu0 %v854
        %v922 = vpop.f32.mrf.mxu0
        %v923 = vadd.f32 0.0, %v922
        %v924 = vpop.f32.mrf.mxu0
        %925 = vdwg.mxu0
        %926 = vrot.lane.b32.xlu0 %v587, 112
        %v927 = vpop.permute.xlu0 %926
        %v930 = vsel %vm852, %v848, 0
        %932 = vmatprep.subr.mxu0 0.0
        %933 = vmatpush1.msra.mxu0 0.0
        %934 = vmatprep.subr.mxu0 0.0
        %935 = vmatpush1.msra.mxu0 0.0
        %936 = vmatprep.subr.mxu0 0.0
        %937 = vmatpush1.msra.mxu0 0.0
        %938 = vmatprep.subr.mxu0 0.0
        %939 = vmatpush1.msra.mxu0 0.0
        %940 = vmatprep.subr.mxu0 0.0
        %941 = vmatpush1.msra.mxu0 0.0
        %942 = vmatprep.subr.mxu0 0.0
        %943 = vmatpush1.msra.mxu0 0.0
        %944 = vmatprep.subr.mxu0 0.0
        %945 = vmatpush1.msra.mxu0 0.0
        %946 = vmatprep.subr.mxu0 0.0
        %947 = vmatpush1.msra.mxu0 0.0
        %948 = vmatprep.subr.mxu0 0.0
        %949 = vmatpush1.msra.mxu0 0.0
        %950 = vmatprep.subr.mxu0 0.0
        %951 = vmatpush1.msra.mxu0 0.0
        %952 = vmatprep.subr.mxu0 0.0
        %953 = vmatpush1.msra.mxu0 0.0
        %954 = vmatprep.subr.mxu0 0.0
        %955 = vmatpush1.msra.mxu0 0.0
        %956 = vmatprep.subr.mxu0 0.0
        %957 = vmatpush1.msra.mxu0 0.0
        %958 = vmatprep.subr.mxu0 0.0
        %959 = vmatpush1.msra.mxu0 0.0
        %960 = vmatprep.subr.mxu0 0.0
        %961 = vmatpush1.msra.mxu0 0.0
        %962 = vmatprep.subr.mxu0 0.0
        %963 = vmatpush1.msra.mxu0 %v927
        %964 = vmatprep.subr.mxu0 0.0
        %965 = vmatpush2.msra.mxu0 0.0
        %966 = vmatprep.subr.mxu0 0.0
        %967 = vmatpush2.msra.mxu0 0.0
        %968 = vmatprep.subr.mxu0 0.0
        %969 = vmatpush2.msra.mxu0 0.0
        %970 = vmatprep.subr.mxu0 0.0
        %971 = vmatpush2.msra.mxu0 0.0
        %972 = vmatprep.subr.mxu0 0.0
        %973 = vmatpush2.msra.mxu0 0.0
        %974 = vmatprep.subr.mxu0 0.0
        %975 = vmatpush2.msra.mxu0 0.0
        %976 = vmatprep.subr.mxu0 0.0
        %977 = vmatpush2.msra.mxu0 0.0
        %978 = vmatprep.subr.mxu0 0.0
        %979 = vmatpush2.msra.mxu0 0.0
        %980 = vmatprep.subr.mxu0 0.0
        %981 = vmatpush2.msra.mxu0 0.0
        %982 = vmatprep.subr.mxu0 0.0
        %983 = vmatpush2.msra.mxu0 0.0
        %984 = vmatprep.subr.mxu0 0.0
        %985 = vmatpush2.msra.mxu0 0.0
        %986 = vmatprep.subr.mxu0 0.0
        %987 = vmatpush2.msra.mxu0 0.0
        %988 = vmatprep.subr.mxu0 0.0
        %989 = vmatpush2.msra.mxu0 0.0
        %990 = vmatprep.subr.mxu0 0.0
        %991 = vmatpush2.msra.mxu0 0.0
        %992 = vmatprep.subr.mxu0 0.0
        %993 = vmatpush2.msra.mxu0 0.0
        %994 = vmatprep.subr.mxu0 0.0
        %995 = vmatpush2.msra.mxu0 0.0
        %996 = vmatprep.mubr.f32.mxu0 0.0
        %997 = vmatmul.mubr.f32.gmra.mxu0 %v930
        %v998 = vpop.f32.mrf.mxu0
        %v999 = vadd.f32 0.0, %v998
        %v1000 = vpop.f32.mrf.mxu0
        %1001 = vdwg.mxu0
        %1002 = vrot.lane.b32.xlu0 %v673, 124
        %v1003 = vpop.permute.xlu0 %1002
        %1004 = vrot.lane.b32.xlu0 %v582, 124
        %v1005 = vpop.permute.xlu0 %1004
        %v1006 = vsel %vm676, %v1003, 0
        %v1008 = vsel %vm676, %v1005, 0
        %1010 = vmatprep.subr.mxu0 0.0
        %1011 = vmatpush1.xpose.msra.mxu0 0.0
        %1012 = vmatprep.subr.mxu0 0.0
        %1013 = vmatpush1.xpose.msra.mxu0 0.0
        %1014 = vmatprep.subr.mxu0 0.0
        %1015 = vmatpush1.xpose.msra.mxu0 0.0
        %1016 = vmatprep.subr.mxu0 0.0
        %1017 = vmatpush1.xpose.msra.mxu0 0.0
        %1018 = vmatprep.subr.mxu0 0.0
        %1019 = vmatpush1.xpose.msra.mxu0 0.0
        %1020 = vmatprep.subr.mxu0 0.0
        %1021 = vmatpush1.xpose.msra.mxu0 0.0
        %1022 = vmatprep.subr.mxu0 0.0
        %1023 = vmatpush1.xpose.msra.mxu0 0.0
        %1024 = vmatprep.subr.mxu0 0.0
        %1025 = vmatpush1.xpose.msra.mxu0 0.0
        %1026 = vmatprep.subr.mxu0 0.0
        %1027 = vmatpush1.xpose.msra.mxu0 0.0
        %1028 = vmatprep.subr.mxu0 0.0
        %1029 = vmatpush1.xpose.msra.mxu0 0.0
        %1030 = vmatprep.subr.mxu0 0.0
        %1031 = vmatpush1.xpose.msra.mxu0 0.0
        %1032 = vmatprep.subr.mxu0 0.0
        %1033 = vmatpush1.xpose.msra.mxu0 0.0
        %1034 = vmatprep.subr.mxu0 0.0
        %1035 = vmatpush1.xpose.msra.mxu0 0.0
        %1036 = vmatprep.subr.mxu0 0.0
        %1037 = vmatpush1.xpose.msra.mxu0 0.0
        %1038 = vmatprep.subr.mxu0 0.0
        %1039 = vmatpush1.xpose.msra.mxu0 0.0
        %1040 = vmatprep.subr.mxu0 0.0
        %1041 = vmatpush1.xpose.msra.mxu0 %v1008
        %1042 = vmatprep.subr.mxu0 0.0
        %1043 = vmatpush2.xpose.msra.mxu0 0.0
        %1044 = vmatprep.subr.mxu0 0.0
        %1045 = vmatpush2.xpose.msra.mxu0 0.0
        %1046 = vmatprep.subr.mxu0 0.0
        %1047 = vmatpush2.xpose.msra.mxu0 0.0
        %1048 = vmatprep.subr.mxu0 0.0
        %1049 = vmatpush2.xpose.msra.mxu0 0.0
        %1050 = vmatprep.subr.mxu0 0.0
        %1051 = vmatpush2.xpose.msra.mxu0 0.0
        %1052 = vmatprep.subr.mxu0 0.0
        %1053 = vmatpush2.xpose.msra.mxu0 0.0
        %1054 = vmatprep.subr.mxu0 0.0
        %1055 = vmatpush2.xpose.msra.mxu0 0.0
        %1056 = vmatprep.subr.mxu0 0.0
        %1057 = vmatpush2.xpose.msra.mxu0 0.0
        %1058 = vmatprep.subr.mxu0 0.0
        %1059 = vmatpush2.xpose.msra.mxu0 0.0
        %1060 = vmatprep.subr.mxu0 0.0
        %1061 = vmatpush2.xpose.msra.mxu0 0.0
        %1062 = vmatprep.subr.mxu0 0.0
        %1063 = vmatpush2.xpose.msra.mxu0 0.0
        %1064 = vmatprep.subr.mxu0 0.0
        %1065 = vmatpush2.xpose.msra.mxu0 0.0
        %1066 = vmatprep.subr.mxu0 0.0
        %1067 = vmatpush2.xpose.msra.mxu0 0.0
        %1068 = vmatprep.subr.mxu0 0.0
        %1069 = vmatpush2.xpose.msra.mxu0 0.0
        %1070 = vmatprep.subr.mxu0 0.0
        %1071 = vmatpush2.xpose.msra.mxu0 0.0
        %1072 = vmatprep.subr.mxu0 0.0
        %1073 = vmatpush2.xpose.msra.mxu0 0.0
        %1074 = vmatprep.mubr.f32.mxu0 0.0
        %1075 = vmatmul.mubr.f32.gmra.mxu0 %v1006
        %v1076 = vpop.f32.mrf.mxu0
        %v1077 = vadd.f32 0.0, %v1076
        %v1078 = vpop.f32.mrf.mxu0
        %1079 = vdwg.mxu0
        %1080 = vrot.lane.b32.xlu0 %v587, 124
        %v1081 = vpop.permute.xlu0 %1080
        %v1082 = vsel %vm676, %v1081, 0
        %1084 = vmatprep.subr.mxu0 0.0
        %1085 = vmatpush1.xpose.msra.mxu0 0.0
        %1086 = vmatprep.subr.mxu0 0.0
        %1087 = vmatpush1.xpose.msra.mxu0 0.0
        %1088 = vmatprep.subr.mxu0 0.0
        %1089 = vmatpush1.xpose.msra.mxu0 0.0
        %1090 = vmatprep.subr.mxu0 0.0
        %1091 = vmatpush1.xpose.msra.mxu0 0.0
        %1092 = vmatprep.subr.mxu0 0.0
        %1093 = vmatpush1.xpose.msra.mxu0 0.0
        %1094 = vmatprep.subr.mxu0 0.0
        %1095 = vmatpush1.xpose.msra.mxu0 0.0
        %1096 = vmatprep.subr.mxu0 0.0
        %1097 = vmatpush1.xpose.msra.mxu0 0.0
        %1098 = vmatprep.subr.mxu0 0.0
        %1099 = vmatpush1.xpose.msra.mxu0 0.0
        %1100 = vmatprep.subr.mxu0 0.0
        %1101 = vmatpush1.xpose.msra.mxu0 0.0
        %1102 = vmatprep.subr.mxu0 0.0
        %1103 = vmatpush1.xpose.msra.mxu0 0.0
        %1104 = vmatprep.subr.mxu0 0.0
        %1105 = vmatpush1.xpose.msra.mxu0 0.0
        %1106 = vmatprep.subr.mxu0 0.0
        %1107 = vmatpush1.xpose.msra.mxu0 0.0
        %1108 = vmatprep.subr.mxu0 0.0
        %1109 = vmatpush1.xpose.msra.mxu0 0.0
        %1110 = vmatprep.subr.mxu0 0.0
        %1111 = vmatpush1.xpose.msra.mxu0 0.0
        %1112 = vmatprep.subr.mxu0 0.0
        %1113 = vmatpush1.xpose.msra.mxu0 0.0
        %1114 = vmatprep.subr.mxu0 0.0
        %1115 = vmatpush1.xpose.msra.mxu0 %v1082
        %1116 = vmatprep.subr.mxu0 0.0
        %1117 = vmatpush2.xpose.msra.mxu0 0.0
        %1118 = vmatprep.subr.mxu0 0.0
        %1119 = vmatpush2.xpose.msra.mxu0 0.0
        %1120 = vmatprep.subr.mxu0 0.0
        %1121 = vmatpush2.xpose.msra.mxu0 0.0
        %1122 = vmatprep.subr.mxu0 0.0
        %1123 = vmatpush2.xpose.msra.mxu0 0.0
        %1124 = vmatprep.subr.mxu0 0.0
        %1125 = vmatpush2.xpose.msra.mxu0 0.0
        %1126 = vmatprep.subr.mxu0 0.0
        %1127 = vmatpush2.xpose.msra.mxu0 0.0
        %1128 = vmatprep.subr.mxu0 0.0
        %1129 = vmatpush2.xpose.msra.mxu0 0.0
        %1130 = vmatprep.subr.mxu0 0.0
        %1131 = vmatpush2.xpose.msra.mxu0 0.0
        %1132 = vmatprep.subr.mxu0 0.0
        %1133 = vmatpush2.xpose.msra.mxu0 0.0
        %1134 = vmatprep.subr.mxu0 0.0
        %1135 = vmatpush2.xpose.msra.mxu0 0.0
        %1136 = vmatprep.subr.mxu0 0.0
        %1137 = vmatpush2.xpose.msra.mxu0 0.0
        %1138 = vmatprep.subr.mxu0 0.0
        %1139 = vmatpush2.xpose.msra.mxu0 0.0
        %1140 = vmatprep.subr.mxu0 0.0
        %1141 = vmatpush2.xpose.msra.mxu0 0.0
        %1142 = vmatprep.subr.mxu0 0.0
        %1143 = vmatpush2.xpose.msra.mxu0 0.0
        %1144 = vmatprep.subr.mxu0 0.0
        %1145 = vmatpush2.xpose.msra.mxu0 0.0
        %1146 = vmatprep.subr.mxu0 0.0
        %1147 = vmatpush2.xpose.msra.mxu0 0.0
        %1148 = vmatprep.mubr.f32.mxu0 0.0
        %1149 = vmatmul.mubr.f32.gmra.mxu0 %v1006
        %v1150 = vpop.f32.mrf.mxu0
        %v1151 = vadd.f32 0.0, %v1150
        %v1152 = vpop.f32.mrf.mxu0
        %1153 = vdwg.mxu0
        %v1154 = vsel %vm826, %v1077, -inf
        %1155 = vmax.xlane.f32.xlu0 %v1154
        %v1156 = vpop.xlane.xlu0 %1155
        %v1157 = vsel %vm826, %v1151, -inf
        %1158 = vmax.xlane.f32.xlu0 %v1157
        %v1159 = vpop.xlane.xlu0 %1158
        %v1160 = vsub.f32 %v1077, %v1156
        %v1161 = vsub.f32 %v1151, %v1159
        %v1162 = vmul.f32 %v1160, 1.442695
        %v1163 = vpow.pop %v1162
        %v1164 = vmul.f32 %v1161, 1.442695
        %v1165 = vpow.pop %v1164
        %v1166 = vsel %vm826, %v1163, 0.0
        %1167 = vadd.xlane.f32.xlu0 %v1166
        %v1168 = vpop.xlane.xlu0 %1167
        %v1169 = vsel %vm826, %v1165, 0.0
        %1170 = vadd.xlane.f32.xlu0 %v1169
        %v1171 = vpop.xlane.xlu0 %1170
        %v1172 = vrcp.pop %v1168
        %v1173 = vmul.f32 %v1163, %v1172
        %v1174 = vrcp.pop %v1171
        %v1175 = vmul.f32 %v1165, %v1174
        %1176 = vrot.lane.b32.xlu0 %v582, 108
        %v1177 = vpop.permute.xlu0 %1176
        %v1180 = vsel %vm852, %v1173, 0
        %1182 = vmatprep.subr.mxu0 0.0
        %1183 = vmatpush1.msra.mxu0 0.0
        %1184 = vmatprep.subr.mxu0 0.0
        %1185 = vmatpush1.msra.mxu0 0.0
        %1186 = vmatprep.subr.mxu0 0.0
        %1187 = vmatpush1.msra.mxu0 0.0
        %1188 = vmatprep.subr.mxu0 0.0
        %1189 = vmatpush1.msra.mxu0 0.0
        %1190 = vmatprep.subr.mxu0 0.0
        %1191 = vmatpush1.msra.mxu0 0.0
        %1192 = vmatprep.subr.mxu0 0.0
        %1193 = vmatpush1.msra.mxu0 0.0
        %1194 = vmatprep.subr.mxu0 0.0
        %1195 = vmatpush1.msra.mxu0 0.0
        %1196 = vmatprep.subr.mxu0 0.0
        %1197 = vmatpush1.msra.mxu0 0.0
        %1198 = vmatprep.subr.mxu0 0.0
        %1199 = vmatpush1.msra.mxu0 0.0
        %1200 = vmatprep.subr.mxu0 0.0
        %1201 = vmatpush1.msra.mxu0 0.0
        %1202 = vmatprep.subr.mxu0 0.0
        %1203 = vmatpush1.msra.mxu0 0.0
        %1204 = vmatprep.subr.mxu0 0.0
        %1205 = vmatpush1.msra.mxu0 0.0
        %1206 = vmatprep.subr.mxu0 0.0
        %1207 = vmatpush1.msra.mxu0 0.0
        %1208 = vmatprep.subr.mxu0 0.0
        %1209 = vmatpush1.msra.mxu0 0.0
        %1210 = vmatprep.subr.mxu0 0.0
        %1211 = vmatpush1.msra.mxu0 0.0
        %1212 = vmatprep.subr.mxu0 0.0
        %1213 = vmatpush1.msra.mxu0 %v1177
        %1214 = vmatprep.subr.mxu0 0.0
        %1215 = vmatpush2.msra.mxu0 0.0
        %1216 = vmatprep.subr.mxu0 0.0
        %1217 = vmatpush2.msra.mxu0 0.0
        %1218 = vmatprep.subr.mxu0 0.0
        %1219 = vmatpush2.msra.mxu0 0.0
        %1220 = vmatprep.subr.mxu0 0.0
        %1221 = vmatpush2.msra.mxu0 0.0
        %1222 = vmatprep.subr.mxu0 0.0
        %1223 = vmatpush2.msra.mxu0 0.0
        %1224 = vmatprep.subr.mxu0 0.0
        %1225 = vmatpush2.msra.mxu0 0.0
        %1226 = vmatprep.subr.mxu0 0.0
        %1227 = vmatpush2.msra.mxu0 0.0
        %1228 = vmatprep.subr.mxu0 0.0
        %1229 = vmatpush2.msra.mxu0 0.0
        %1230 = vmatprep.subr.mxu0 0.0
        %1231 = vmatpush2.msra.mxu0 0.0
        %1232 = vmatprep.subr.mxu0 0.0
        %1233 = vmatpush2.msra.mxu0 0.0
        %1234 = vmatprep.subr.mxu0 0.0
        %1235 = vmatpush2.msra.mxu0 0.0
        %1236 = vmatprep.subr.mxu0 0.0
        %1237 = vmatpush2.msra.mxu0 0.0
        %1238 = vmatprep.subr.mxu0 0.0
        %1239 = vmatpush2.msra.mxu0 0.0
        %1240 = vmatprep.subr.mxu0 0.0
        %1241 = vmatpush2.msra.mxu0 0.0
        %1242 = vmatprep.subr.mxu0 0.0
        %1243 = vmatpush2.msra.mxu0 0.0
        %1244 = vmatprep.subr.mxu0 0.0
        %1245 = vmatpush2.msra.mxu0 0.0
        %1246 = vmatprep.mubr.f32.mxu0 0.0
        %1247 = vmatmul.mubr.f32.gmra.mxu0 %v1180
        %v1248 = vpop.f32.mrf.mxu0
        %v1249 = vadd.f32 0.0, %v1248
        %v1250 = vpop.f32.mrf.mxu0
        %1251 = vdwg.mxu0
        %1252 = vrot.lane.b32.xlu0 %v587, 108
        %v1253 = vpop.permute.xlu0 %1252
        %v1256 = vsel %vm852, %v1175, 0
        %1258 = vmatprep.subr.mxu0 0.0
        %1259 = vmatpush1.msra.mxu0 0.0
        %1260 = vmatprep.subr.mxu0 0.0
        %1261 = vmatpush1.msra.mxu0 0.0
        %1262 = vmatprep.subr.mxu0 0.0
        %1263 = vmatpush1.msra.mxu0 0.0
        %1264 = vmatprep.subr.mxu0 0.0
        %1265 = vmatpush1.msra.mxu0 0.0
        %1266 = vmatprep.subr.mxu0 0.0
        %1267 = vmatpush1.msra.mxu0 0.0
        %1268 = vmatprep.subr.mxu0 0.0
        %1269 = vmatpush1.msra.mxu0 0.0
        %1270 = vmatprep.subr.mxu0 0.0
        %1271 = vmatpush1.msra.mxu0 0.0
        %1272 = vmatprep.subr.mxu0 0.0
        %1273 = vmatpush1.msra.mxu0 0.0
        %1274 = vmatprep.subr.mxu0 0.0
        %1275 = vmatpush1.msra.mxu0 0.0
        %1276 = vmatprep.subr.mxu0 0.0
        %1277 = vmatpush1.msra.mxu0 0.0
        %1278 = vmatprep.subr.mxu0 0.0
        %1279 = vmatpush1.msra.mxu0 0.0
        %1280 = vmatprep.subr.mxu0 0.0
        %1281 = vmatpush1.msra.mxu0 0.0
        %1282 = vmatprep.subr.mxu0 0.0
        %1283 = vmatpush1.msra.mxu0 0.0
        %1284 = vmatprep.subr.mxu0 0.0
        %1285 = vmatpush1.msra.mxu0 0.0
        %1286 = vmatprep.subr.mxu0 0.0
        %1287 = vmatpush1.msra.mxu0 0.0
        %1288 = vmatprep.subr.mxu0 0.0
        %1289 = vmatpush1.msra.mxu0 %v1253
        %1290 = vmatprep.subr.mxu0 0.0
        %1291 = vmatpush2.msra.mxu0 0.0
        %1292 = vmatprep.subr.mxu0 0.0
        %1293 = vmatpush2.msra.mxu0 0.0
        %1294 = vmatprep.subr.mxu0 0.0
        %1295 = vmatpush2.msra.mxu0 0.0
        %1296 = vmatprep.subr.mxu0 0.0
        %1297 = vmatpush2.msra.mxu0 0.0
        %1298 = vmatprep.subr.mxu0 0.0
        %1299 = vmatpush2.msra.mxu0 0.0
        %1300 = vmatprep.subr.mxu0 0.0
        %1301 = vmatpush2.msra.mxu0 0.0
        %1302 = vmatprep.subr.mxu0 0.0
        %1303 = vmatpush2.msra.mxu0 0.0
        %1304 = vmatprep.subr.mxu0 0.0
        %1305 = vmatpush2.msra.mxu0 0.0
        %1306 = vmatprep.subr.mxu0 0.0
        %1307 = vmatpush2.msra.mxu0 0.0
        %1308 = vmatprep.subr.mxu0 0.0
        %1309 = vmatpush2.msra.mxu0 0.0
        %1310 = vmatprep.subr.mxu0 0.0
        %1311 = vmatpush2.msra.mxu0 0.0
        %1312 = vmatprep.subr.mxu0 0.0
        %1313 = vmatpush2.msra.mxu0 0.0
        %1314 = vmatprep.subr.mxu0 0.0
        %1315 = vmatpush2.msra.mxu0 0.0
        %1316 = vmatprep.subr.mxu0 0.0
        %1317 = vmatpush2.msra.mxu0 0.0
        %1318 = vmatprep.subr.mxu0 0.0
        %1319 = vmatpush2.msra.mxu0 0.0
        %1320 = vmatprep.subr.mxu0 0.0
        %1321 = vmatpush2.msra.mxu0 0.0
        %1322 = vmatprep.mubr.f32.mxu0 0.0
        %1323 = vmatmul.mubr.f32.gmra.mxu0 %v1256
        %v1324 = vpop.f32.mrf.mxu0
        %v1325 = vadd.f32 0.0, %v1324
        %v1326 = vpop.f32.mrf.mxu0
        %1327 = vdwg.mxu0
        %v1330 = vcombine.low %v1249, %v1325
        %v1332 = vrot.slane %v674, 4
        %v1333 = vsel %vm676, %v1330, 0
        %vm1335 = vcmask 1043456
        %v1336 = vsel %vm1335, %v1332, 0
        %1338 = vmatprep.subr.mxu0 0.0
        %1339 = vmatpush1.msra.mxu0 0.0
        %1340 = vmatprep.subr.mxu0 0.0
        %1341 = vmatpush1.msra.mxu0 0.0
        %1342 = vmatprep.subr.mxu0 0.0
        %1343 = vmatpush1.msra.mxu0 0.0
        %1344 = vmatprep.subr.mxu0 0.0
        %1345 = vmatpush1.msra.mxu0 0.0
        %1346 = vmatprep.subr.mxu0 0.0
        %1347 = vmatpush1.msra.mxu0 0.0
        %1348 = vmatprep.subr.mxu0 0.0
        %1349 = vmatpush1.msra.mxu0 0.0
        %1350 = vmatprep.subr.mxu0 0.0
        %1351 = vmatpush1.msra.mxu0 0.0
        %1352 = vmatprep.subr.mxu0 0.0
        %1353 = vmatpush1.msra.mxu0 0.0
        %1354 = vmatprep.subr.mxu0 0.0
        %1355 = vmatpush1.msra.mxu0 0.0
        %1356 = vmatprep.subr.mxu0 0.0
        %1357 = vmatpush1.msra.mxu0 0.0
        %1358 = vmatprep.subr.mxu0 0.0
        %1359 = vmatpush1.msra.mxu0 0.0
        %1360 = vmatprep.subr.mxu0 0.0
        %1361 = vmatpush1.msra.mxu0 0.0
        %1362 = vmatprep.subr.mxu0 0.0
        %1363 = vmatpush1.msra.mxu0 0.0
        %1364 = vmatprep.subr.mxu0 0.0
        %1365 = vmatpush1.msra.mxu0 0.0
        %1366 = vmatprep.subr.mxu0 0.0
        %1367 = vmatpush1.msra.mxu0 0.0
        %1368 = vmatprep.subr.mxu0 0.0
        %1369 = vmatpush1.msra.mxu0 %v1336
        %1370 = vmatprep.subr.mxu0 0.0
        %1371 = vmatpush2.msra.mxu0 0.0
        %1372 = vmatprep.subr.mxu0 0.0
        %1373 = vmatpush2.msra.mxu0 0.0
        %1374 = vmatprep.subr.mxu0 0.0
        %1375 = vmatpush2.msra.mxu0 0.0
        %1376 = vmatprep.subr.mxu0 0.0
        %1377 = vmatpush2.msra.mxu0 0.0
        %1378 = vmatprep.subr.mxu0 0.0
        %1379 = vmatpush2.msra.mxu0 0.0
        %1380 = vmatprep.subr.mxu0 0.0
        %1381 = vmatpush2.msra.mxu0 0.0
        %1382 = vmatprep.subr.mxu0 0.0
        %1383 = vmatpush2.msra.mxu0 0.0
        %1384 = vmatprep.subr.mxu0 0.0
        %1385 = vmatpush2.msra.mxu0 0.0
        %1386 = vmatprep.subr.mxu0 0.0
        %1387 = vmatpush2.msra.mxu0 0.0
        %1388 = vmatprep.subr.mxu0 0.0
        %1389 = vmatpush2.msra.mxu0 0.0
        %1390 = vmatprep.subr.mxu0 0.0
        %1391 = vmatpush2.msra.mxu0 0.0
        %1392 = vmatprep.subr.mxu0 0.0
        %1393 = vmatpush2.msra.mxu0 0.0
        %1394 = vmatprep.subr.mxu0 0.0
        %1395 = vmatpush2.msra.mxu0 0.0
        %1396 = vmatprep.subr.mxu0 0.0
        %1397 = vmatpush2.msra.mxu0 0.0
        %1398 = vmatprep.subr.mxu0 0.0
        %1399 = vmatpush2.msra.mxu0 0.0
        %1400 = vmatprep.subr.mxu0 0.0
        %1401 = vmatpush2.msra.mxu0 0.0
        %1402 = vmatprep.mubr.f32.mxu0 0.0
        %1403 = vmatmul.mubr.f32.gmra.mxu0 %v1333
        %v1404 = vpop.f32.mrf.mxu0
        %v1405 = vadd.f32 0.0, %v1404
        %v1406 = vpop.f32.mrf.mxu0
        %1407 = vdwg.mxu0
        %v1410 = vcombine.low %v923, %v999
        %v1411 = vsel %vm676, %v1410, 0
        %v1413 = vsel %vm1335, %v674, 0
        %1415 = vmatprep.subr.mxu0 0.0
        %1416 = vmatpush1.msra.mxu0 0.0
        %1417 = vmatprep.subr.mxu0 0.0
        %1418 = vmatpush1.msra.mxu0 0.0
        %1419 = vmatprep.subr.mxu0 0.0
        %1420 = vmatpush1.msra.mxu0 0.0
        %1421 = vmatprep.subr.mxu0 0.0
        %1422 = vmatpush1.msra.mxu0 0.0
        %1423 = vmatprep.subr.mxu0 0.0
        %1424 = vmatpush1.msra.mxu0 0.0
        %1425 = vmatprep.subr.mxu0 0.0
        %1426 = vmatpush1.msra.mxu0 0.0
        %1427 = vmatprep.subr.mxu0 0.0
        %1428 = vmatpush1.msra.mxu0 0.0
        %1429 = vmatprep.subr.mxu0 0.0
        %1430 = vmatpush1.msra.mxu0 0.0
        %1431 = vmatprep.subr.mxu0 0.0
        %1432 = vmatpush1.msra.mxu0 0.0
        %1433 = vmatprep.subr.mxu0 0.0
        %1434 = vmatpush1.msra.mxu0 0.0
        %1435 = vmatprep.subr.mxu0 0.0
        %1436 = vmatpush1.msra.mxu0 0.0
        %1437 = vmatprep.subr.mxu0 0.0
        %1438 = vmatpush1.msra.mxu0 0.0
        %1439 = vmatprep.subr.mxu0 0.0
        %1440 = vmatpush1.msra.mxu0 0.0
        %1441 = vmatprep.subr.mxu0 0.0
        %1442 = vmatpush1.msra.mxu0 0.0
        %1443 = vmatprep.subr.mxu0 0.0
        %1444 = vmatpush1.msra.mxu0 0.0
        %1445 = vmatprep.subr.mxu0 0.0
        %1446 = vmatpush1.msra.mxu0 %v1413
        %1447 = vmatprep.subr.mxu0 0.0
        %1448 = vmatpush2.msra.mxu0 0.0
        %1449 = vmatprep.subr.mxu0 0.0
        %1450 = vmatpush2.msra.mxu0 0.0
        %1451 = vmatprep.subr.mxu0 0.0
        %1452 = vmatpush2.msra.mxu0 0.0
        %1453 = vmatprep.subr.mxu0 0.0
        %1454 = vmatpush2.msra.mxu0 0.0
        %1455 = vmatprep.subr.mxu0 0.0
        %1456 = vmatpush2.msra.mxu0 0.0
        %1457 = vmatprep.subr.mxu0 0.0
        %1458 = vmatpush2.msra.mxu0 0.0
        %1459 = vmatprep.subr.mxu0 0.0
        %1460 = vmatpush2.msra.mxu0 0.0
        %1461 = vmatprep.subr.mxu0 0.0
        %1462 = vmatpush2.msra.mxu0 0.0
        %1463 = vmatprep.subr.mxu0 0.0
        %1464 = vmatpush2.msra.mxu0 0.0
        %1465 = vmatprep.subr.mxu0 0.0
        %1466 = vmatpush2.msra.mxu0 0.0
        %1467 = vmatprep.subr.mxu0 0.0
        %1468 = vmatpush2.msra.mxu0 0.0
        %1469 = vmatprep.subr.mxu0 0.0
        %1470 = vmatpush2.msra.mxu0 0.0
        %1471 = vmatprep.subr.mxu0 0.0
        %1472 = vmatpush2.msra.mxu0 0.0
        %1473 = vmatprep.subr.mxu0 0.0
        %1474 = vmatpush2.msra.mxu0 0.0
        %1475 = vmatprep.subr.mxu0 0.0
        %1476 = vmatpush2.msra.mxu0 0.0
        %1477 = vmatprep.subr.mxu0 0.0
        %1478 = vmatpush2.msra.mxu0 0.0
        %1479 = vmatprep.mubr.f32.mxu0 0.0
        %1480 = vmatmul.mubr.f32.gmra.mxu0 %v1411
        %v1481 = vpop.f32.mrf.mxu0
        %v1482 = vadd.f32 %v1405, %v1481
        %v1483 = vpop.f32.mrf.mxu0
        %1484 = vdwg.mxu0
        %1485 = vrot.lane.b32.xlu0 %v673, 120
        %v1486 = vpop.permute.xlu0 %1485
        %1487 = vrot.lane.b32.xlu0 %v582, 120
        %v1488 = vpop.permute.xlu0 %1487
        %v1489 = vsel %vm676, %v1486, 0
        %v1491 = vsel %vm676, %v1488, 0
        %1493 = vmatprep.subr.mxu0 0.0
        %1494 = vmatpush1.xpose.msra.mxu0 0.0
        %1495 = vmatprep.subr.mxu0 0.0
        %1496 = vmatpush1.xpose.msra.mxu0 0.0
        %1497 = vmatprep.subr.mxu0 0.0
        %1498 = vmatpush1.xpose.msra.mxu0 0.0
        %1499 = vmatprep.subr.mxu0 0.0
        %1500 = vmatpush1.xpose.msra.mxu0 0.0
        %1501 = vmatprep.subr.mxu0 0.0
        %1502 = vmatpush1.xpose.msra.mxu0 0.0
        %1503 = vmatprep.subr.mxu0 0.0
        %1504 = vmatpush1.xpose.msra.mxu0 0.0
        %1505 = vmatprep.subr.mxu0 0.0
        %1506 = vmatpush1.xpose.msra.mxu0 0.0
        %1507 = vmatprep.subr.mxu0 0.0
        %1508 = vmatpush1.xpose.msra.mxu0 0.0
        %1509 = vmatprep.subr.mxu0 0.0
        %1510 = vmatpush1.xpose.msra.mxu0 0.0
        %1511 = vmatprep.subr.mxu0 0.0
        %1512 = vmatpush1.xpose.msra.mxu0 0.0
        %1513 = vmatprep.subr.mxu0 0.0
        %1514 = vmatpush1.xpose.msra.mxu0 0.0
        %1515 = vmatprep.subr.mxu0 0.0
        %1516 = vmatpush1.xpose.msra.mxu0 0.0
        %1517 = vmatprep.subr.mxu0 0.0
        %1518 = vmatpush1.xpose.msra.mxu0 0.0
        %1519 = vmatprep.subr.mxu0 0.0
        %1520 = vmatpush1.xpose.msra.mxu0 0.0
        %1521 = vmatprep.subr.mxu0 0.0
        %1522 = vmatpush1.xpose.msra.mxu0 0.0
        %1523 = vmatprep.subr.mxu0 0.0
        %1524 = vmatpush1.xpose.msra.mxu0 %v1491
        %1525 = vmatprep.subr.mxu0 0.0
        %1526 = vmatpush2.xpose.msra.mxu0 0.0
        %1527 = vmatprep.subr.mxu0 0.0
        %1528 = vmatpush2.xpose.msra.mxu0 0.0
        %1529 = vmatprep.subr.mxu0 0.0
        %1530 = vmatpush2.xpose.msra.mxu0 0.0
        %1531 = vmatprep.subr.mxu0 0.0
        %1532 = vmatpush2.xpose.msra.mxu0 0.0
        %1533 = vmatprep.subr.mxu0 0.0
        %1534 = vmatpush2.xpose.msra.mxu0 0.0
        %1535 = vmatprep.subr.mxu0 0.0
        %1536 = vmatpush2.xpose.msra.mxu0 0.0
        %1537 = vmatprep.subr.mxu0 0.0
        %1538 = vmatpush2.xpose.msra.mxu0 0.0
        %1539 = vmatprep.subr.mxu0 0.0
        %1540 = vmatpush2.xpose.msra.mxu0 0.0
        %1541 = vmatprep.subr.mxu0 0.0
        %1542 = vmatpush2.xpose.msra.mxu0 0.0
        %1543 = vmatprep.subr.mxu0 0.0
        %1544 = vmatpush2.xpose.msra.mxu0 0.0
        %1545 = vmatprep.subr.mxu0 0.0
        %1546 = vmatpush2.xpose.msra.mxu0 0.0
        %1547 = vmatprep.subr.mxu0 0.0
        %1548 = vmatpush2.xpose.msra.mxu0 0.0
        %1549 = vmatprep.subr.mxu0 0.0
        %1550 = vmatpush2.xpose.msra.mxu0 0.0
        %1551 = vmatprep.subr.mxu0 0.0
        %1552 = vmatpush2.xpose.msra.mxu0 0.0
        %1553 = vmatprep.subr.mxu0 0.0
        %1554 = vmatpush2.xpose.msra.mxu0 0.0
        %1555 = vmatprep.subr.mxu0 0.0
        %1556 = vmatpush2.xpose.msra.mxu0 0.0
        %1557 = vmatprep.mubr.f32.mxu0 0.0
        %1558 = vmatmul.mubr.f32.gmra.mxu0 %v1489
        %v1559 = vpop.f32.mrf.mxu0
        %v1560 = vadd.f32 0.0, %v1559
        %v1561 = vpop.f32.mrf.mxu0
        %1562 = vdwg.mxu0
        %1563 = vrot.lane.b32.xlu0 %v587, 120
        %v1564 = vpop.permute.xlu0 %1563
        %v1565 = vsel %vm676, %v1564, 0
        %1567 = vmatprep.subr.mxu0 0.0
        %1568 = vmatpush1.xpose.msra.mxu0 0.0
        %1569 = vmatprep.subr.mxu0 0.0
        %1570 = vmatpush1.xpose.msra.mxu0 0.0
        %1571 = vmatprep.subr.mxu0 0.0
        %1572 = vmatpush1.xpose.msra.mxu0 0.0
        %1573 = vmatprep.subr.mxu0 0.0
        %1574 = vmatpush1.xpose.msra.mxu0 0.0
        %1575 = vmatprep.subr.mxu0 0.0
        %1576 = vmatpush1.xpose.msra.mxu0 0.0
        %1577 = vmatprep.subr.mxu0 0.0
        %1578 = vmatpush1.xpose.msra.mxu0 0.0
        %1579 = vmatprep.subr.mxu0 0.0
        %1580 = vmatpush1.xpose.msra.mxu0 0.0
        %1581 = vmatprep.subr.mxu0 0.0
        %1582 = vmatpush1.xpose.msra.mxu0 0.0
        %1583 = vmatprep.subr.mxu0 0.0
        %1584 = vmatpush1.xpose.msra.mxu0 0.0
        %1585 = vmatprep.subr.mxu0 0.0
        %1586 = vmatpush1.xpose.msra.mxu0 0.0
        %1587 = vmatprep.subr.mxu0 0.0
        %1588 = vmatpush1.xpose.msra.mxu0 0.0
        %1589 = vmatprep.subr.mxu0 0.0
        %1590 = vmatpush1.xpose.msra.mxu0 0.0
        %1591 = vmatprep.subr.mxu0 0.0
        %1592 = vmatpush1.xpose.msra.mxu0 0.0
        %1593 = vmatprep.subr.mxu0 0.0
        %1594 = vmatpush1.xpose.msra.mxu0 0.0
        %1595 = vmatprep.subr.mxu0 0.0
        %1596 = vmatpush1.xpose.msra.mxu0 0.0
        %1597 = vmatprep.subr.mxu0 0.0
        %1598 = vmatpush1.xpose.msra.mxu0 %v1565
        %1599 = vmatprep.subr.mxu0 0.0
        %1600 = vmatpush2.xpose.msra.mxu0 0.0
        %1601 = vmatprep.subr.mxu0 0.0
        %1602 = vmatpush2.xpose.msra.mxu0 0.0
        %1603 = vmatprep.subr.mxu0 0.0
        %1604 = vmatpush2.xpose.msra.mxu0 0.0
        %1605 = vmatprep.subr.mxu0 0.0
        %1606 = vmatpush2.xpose.msra.mxu0 0.0
        %1607 = vmatprep.subr.mxu0 0.0
        %1608 = vmatpush2.xpose.msra.mxu0 0.0
        %1609 = vmatprep.subr.mxu0 0.0
        %1610 = vmatpush2.xpose.msra.mxu0 0.0
        %1611 = vmatprep.subr.mxu0 0.0
        %1612 = vmatpush2.xpose.msra.mxu0 0.0
        %1613 = vmatprep.subr.mxu0 0.0
        %1614 = vmatpush2.xpose.msra.mxu0 0.0
        %1615 = vmatprep.subr.mxu0 0.0
        %1616 = vmatpush2.xpose.msra.mxu0 0.0
        %1617 = vmatprep.subr.mxu0 0.0
        %1618 = vmatpush2.xpose.msra.mxu0 0.0
        %1619 = vmatprep.subr.mxu0 0.0
        %1620 = vmatpush2.xpose.msra.mxu0 0.0
        %1621 = vmatprep.subr.mxu0 0.0
        %1622 = vmatpush2.xpose.msra.mxu0 0.0
        %1623 = vmatprep.subr.mxu0 0.0
        %1624 = vmatpush2.xpose.msra.mxu0 0.0
        %1625 = vmatprep.subr.mxu0 0.0
        %1626 = vmatpush2.xpose.msra.mxu0 0.0
        %1627 = vmatprep.subr.mxu0 0.0
        %1628 = vmatpush2.xpose.msra.mxu0 0.0
        %1629 = vmatprep.subr.mxu0 0.0
        %1630 = vmatpush2.xpose.msra.mxu0 0.0
        %1631 = vmatprep.mubr.f32.mxu0 0.0
        %1632 = vmatmul.mubr.f32.gmra.mxu0 %v1489
        %v1633 = vpop.f32.mrf.mxu0
        %v1634 = vadd.f32 0.0, %v1633
        %v1635 = vpop.f32.mrf.mxu0
        %1636 = vdwg.mxu0
        %v1637 = vsel %vm826, %v1560, -inf
        %1638 = vmax.xlane.f32.xlu0 %v1637
        %v1639 = vpop.xlane.xlu0 %1638
        %v1640 = vsel %vm826, %v1634, -inf
        %1641 = vmax.xlane.f32.xlu0 %v1640
        %v1642 = vpop.xlane.xlu0 %1641
        %v1643 = vsub.f32 %v1560, %v1639
        %v1644 = vsub.f32 %v1634, %v1642
        %v1645 = vmul.f32 %v1643, 1.442695
        %v1646 = vpow.pop %v1645
        %v1647 = vmul.f32 %v1644, 1.442695
        %v1648 = vpow.pop %v1647
        %v1649 = vsel %vm826, %v1646, 0.0
        %1650 = vadd.xlane.f32.xlu0 %v1649
        %v1651 = vpop.xlane.xlu0 %1650
        %v1652 = vsel %vm826, %v1648, 0.0
        %1653 = vadd.xlane.f32.xlu0 %v1652
        %v1654 = vpop.xlane.xlu0 %1653
        %v1655 = vrcp.pop %v1651
        %v1656 = vmul.f32 %v1646, %v1655
        %v1657 = vrcp.pop %v1654
        %v1658 = vmul.f32 %v1648, %v1657
        %1659 = vrot.lane.b32.xlu0 %v582, 104
        %v1660 = vpop.permute.xlu0 %1659
        %v1663 = vsel %vm852, %v1656, 0
        %1665 = vmatprep.subr.mxu0 0.0
        %1666 = vmatpush1.msra.mxu0 0.0
        %1667 = vmatprep.subr.mxu0 0.0
        %1668 = vmatpush1.msra.mxu0 0.0
        %1669 = vmatprep.subr.mxu0 0.0
        %1670 = vmatpush1.msra.mxu0 0.0
        %1671 = vmatprep.subr.mxu0 0.0
        %1672 = vmatpush1.msra.mxu0 0.0
        %1673 = vmatprep.subr.mxu0 0.0
        %1674 = vmatpush1.msra.mxu0 0.0
        %1675 = vmatprep.subr.mxu0 0.0
        %1676 = vmatpush1.msra.mxu0 0.0
        %1677 = vmatprep.subr.mxu0 0.0
        %1678 = vmatpush1.msra.mxu0 0.0
        %1679 = vmatprep.subr.mxu0 0.0
        %1680 = vmatpush1.msra.mxu0 0.0
        %1681 = vmatprep.subr.mxu0 0.0
        %1682 = vmatpush1.msra.mxu0 0.0
        %1683 = vmatprep.subr.mxu0 0.0
        %1684 = vmatpush1.msra.mxu0 0.0
        %1685 = vmatprep.subr.mxu0 0.0
        %1686 = vmatpush1.msra.mxu0 0.0
        %1687 = vmatprep.subr.mxu0 0.0
        %1688 = vmatpush1.msra.mxu0 0.0
        %1689 = vmatprep.subr.mxu0 0.0
        %1690 = vmatpush1.msra.mxu0 0.0
        %1691 = vmatprep.subr.mxu0 0.0
        %1692 = vmatpush1.msra.mxu0 0.0
        %1693 = vmatprep.subr.mxu0 0.0
        %1694 = vmatpush1.msra.mxu0 0.0
        %1695 = vmatprep.subr.mxu0 0.0
        %1696 = vmatpush1.msra.mxu0 %v1660
        %1697 = vmatprep.subr.mxu0 0.0
        %1698 = vmatpush2.msra.mxu0 0.0
        %1699 = vmatprep.subr.mxu0 0.0
        %1700 = vmatpush2.msra.mxu0 0.0
        %1701 = vmatprep.subr.mxu0 0.0
        %1702 = vmatpush2.msra.mxu0 0.0
        %1703 = vmatprep.subr.mxu0 0.0
        %1704 = vmatpush2.msra.mxu0 0.0
        %1705 = vmatprep.subr.mxu0 0.0
        %1706 = vmatpush2.msra.mxu0 0.0
        %1707 = vmatprep.subr.mxu0 0.0
        %1708 = vmatpush2.msra.mxu0 0.0
        %1709 = vmatprep.subr.mxu0 0.0
        %1710 = vmatpush2.msra.mxu0 0.0
        %1711 = vmatprep.subr.mxu0 0.0
        %1712 = vmatpush2.msra.mxu0 0.0
        %1713 = vmatprep.subr.mxu0 0.0
        %1714 = vmatpush2.msra.mxu0 0.0
        %1715 = vmatprep.subr.mxu0 0.0
        %1716 = vmatpush2.msra.mxu0 0.0
        %1717 = vmatprep.subr.mxu0 0.0
        %1718 = vmatpush2.msra.mxu0 0.0
        %1719 = vmatprep.subr.mxu0 0.0
        %1720 = vmatpush2.msra.mxu0 0.0
        %1721 = vmatprep.subr.mxu0 0.0
        %1722 = vmatpush2.msra.mxu0 0.0
        %1723 = vmatprep.subr.mxu0 0.0
        %1724 = vmatpush2.msra.mxu0 0.0
        %1725 = vmatprep.subr.mxu0 0.0
        %1726 = vmatpush2.msra.mxu0 0.0
        %1727 = vmatprep.subr.mxu0 0.0
        %1728 = vmatpush2.msra.mxu0 0.0
        %1729 = vmatprep.mubr.f32.mxu0 0.0
        %1730 = vmatmul.mubr.f32.gmra.mxu0 %v1663
        %v1731 = vpop.f32.mrf.mxu0
        %v1732 = vadd.f32 0.0, %v1731
        %v1733 = vpop.f32.mrf.mxu0
        %1734 = vdwg.mxu0
        %1735 = vrot.lane.b32.xlu0 %v587, 104
        %v1736 = vpop.permute.xlu0 %1735
        %v1739 = vsel %vm852, %v1658, 0
        %1741 = vmatprep.subr.mxu0 0.0
        %1742 = vmatpush1.msra.mxu0 0.0
        %1743 = vmatprep.subr.mxu0 0.0
        %1744 = vmatpush1.msra.mxu0 0.0
        %1745 = vmatprep.subr.mxu0 0.0
        %1746 = vmatpush1.msra.mxu0 0.0
        %1747 = vmatprep.subr.mxu0 0.0
        %1748 = vmatpush1.msra.mxu0 0.0
        %1749 = vmatprep.subr.mxu0 0.0
        %1750 = vmatpush1.msra.mxu0 0.0
        %1751 = vmatprep.subr.mxu0 0.0
        %1752 = vmatpush1.msra.mxu0 0.0
        %1753 = vmatprep.subr.mxu0 0.0
        %1754 = vmatpush1.msra.mxu0 0.0
        %1755 = vmatprep.subr.mxu0 0.0
        %1756 = vmatpush1.msra.mxu0 0.0
        %1757 = vmatprep.subr.mxu0 0.0
        %1758 = vmatpush1.msra.mxu0 0.0
        %1759 = vmatprep.subr.mxu0 0.0
        %1760 = vmatpush1.msra.mxu0 0.0
        %1761 = vmatprep.subr.mxu0 0.0
        %1762 = vmatpush1.msra.mxu0 0.0
        %1763 = vmatprep.subr.mxu0 0.0
        %1764 = vmatpush1.msra.mxu0 0.0
        %1765 = vmatprep.subr.mxu0 0.0
        %1766 = vmatpush1.msra.mxu0 0.0
        %1767 = vmatprep.subr.mxu0 0.0
        %1768 = vmatpush1.msra.mxu0 0.0
        %1769 = vmatprep.subr.mxu0 0.0
        %1770 = vmatpush1.msra.mxu0 0.0
        %1771 = vmatprep.subr.mxu0 0.0
        %1772 = vmatpush1.msra.mxu0 %v1736
        %1773 = vmatprep.subr.mxu0 0.0
        %1774 = vmatpush2.msra.mxu0 0.0
        %1775 = vmatprep.subr.mxu0 0.0
        %1776 = vmatpush2.msra.mxu0 0.0
        %1777 = vmatprep.subr.mxu0 0.0
        %1778 = vmatpush2.msra.mxu0 0.0
        %1779 = vmatprep.subr.mxu0 0.0
        %1780 = vmatpush2.msra.mxu0 0.0
        %1781 = vmatprep.subr.mxu0 0.0
        %1782 = vmatpush2.msra.mxu0 0.0
        %1783 = vmatprep.subr.mxu0 0.0
        %1784 = vmatpush2.msra.mxu0 0.0
        %1785 = vmatprep.subr.mxu0 0.0
        %1786 = vmatpush2.msra.mxu0 0.0
        %1787 = vmatprep.subr.mxu0 0.0
        %1788 = vmatpush2.msra.mxu0 0.0
        %1789 = vmatprep.subr.mxu0 0.0
        %1790 = vmatpush2.msra.mxu0 0.0
        %1791 = vmatprep.subr.mxu0 0.0
        %1792 = vmatpush2.msra.mxu0 0.0
        %1793 = vmatprep.subr.mxu0 0.0
        %1794 = vmatpush2.msra.mxu0 0.0
        %1795 = vmatprep.subr.mxu0 0.0
        %1796 = vmatpush2.msra.mxu0 0.0
        %1797 = vmatprep.subr.mxu0 0.0
        %1798 = vmatpush2.msra.mxu0 0.0
        %1799 = vmatprep.subr.mxu0 0.0
        %1800 = vmatpush2.msra.mxu0 0.0
        %1801 = vmatprep.subr.mxu0 0.0
        %1802 = vmatpush2.msra.mxu0 0.0
        %1803 = vmatprep.subr.mxu0 0.0
        %1804 = vmatpush2.msra.mxu0 0.0
        %1805 = vmatprep.mubr.f32.mxu0 0.0
        %1806 = vmatmul.mubr.f32.gmra.mxu0 %v1739
        %v1807 = vpop.f32.mrf.mxu0
        %v1808 = vadd.f32 0.0, %v1807
        %v1809 = vpop.f32.mrf.mxu0
        %1810 = vdwg.mxu0
        %v1813 = vcombine.low %v1732, %v1808
        %v1814 = vsel %vm676, %v1813, 0
        %v1817 = vsel %vm1335, %v675, 0
        %1819 = vmatprep.subr.mxu0 0.0
        %1820 = vmatpush1.msra.mxu0 0.0
        %1821 = vmatprep.subr.mxu0 0.0
        %1822 = vmatpush1.msra.mxu0 0.0
        %1823 = vmatprep.subr.mxu0 0.0
        %1824 = vmatpush1.msra.mxu0 0.0
        %1825 = vmatprep.subr.mxu0 0.0
        %1826 = vmatpush1.msra.mxu0 0.0
        %1827 = vmatprep.subr.mxu0 0.0
        %1828 = vmatpush1.msra.mxu0 0.0
        %1829 = vmatprep.subr.mxu0 0.0
        %1830 = vmatpush1.msra.mxu0 0.0
        %1831 = vmatprep.subr.mxu0 0.0
        %1832 = vmatpush1.msra.mxu0 0.0
        %1833 = vmatprep.subr.mxu0 0.0
        %1834 = vmatpush1.msra.mxu0 0.0
        %1835 = vmatprep.subr.mxu0 0.0
        %1836 = vmatpush1.msra.mxu0 0.0
        %1837 = vmatprep.subr.mxu0 0.0
        %1838 = vmatpush1.msra.mxu0 0.0
        %1839 = vmatprep.subr.mxu0 0.0
        %1840 = vmatpush1.msra.mxu0 0.0
        %1841 = vmatprep.subr.mxu0 0.0
        %1842 = vmatpush1.msra.mxu0 0.0
        %1843 = vmatprep.subr.mxu0 0.0
        %1844 = vmatpush1.msra.mxu0 0.0
        %1845 = vmatprep.subr.mxu0 0.0
        %1846 = vmatpush1.msra.mxu0 0.0
        %1847 = vmatprep.subr.mxu0 0.0
        %1848 = vmatpush1.msra.mxu0 0.0
        %1849 = vmatprep.subr.mxu0 0.0
        %1850 = vmatpush1.msra.mxu0 %v1817
        %1851 = vmatprep.subr.mxu0 0.0
        %1852 = vmatpush2.msra.mxu0 0.0
        %1853 = vmatprep.subr.mxu0 0.0
        %1854 = vmatpush2.msra.mxu0 0.0
        %1855 = vmatprep.subr.mxu0 0.0
        %1856 = vmatpush2.msra.mxu0 0.0
        %1857 = vmatprep.subr.mxu0 0.0
        %1858 = vmatpush2.msra.mxu0 0.0
        %1859 = vmatprep.subr.mxu0 0.0
        %1860 = vmatpush2.msra.mxu0 0.0
        %1861 = vmatprep.subr.mxu0 0.0
        %1862 = vmatpush2.msra.mxu0 0.0
        %1863 = vmatprep.subr.mxu0 0.0
        %1864 = vmatpush2.msra.mxu0 0.0
        %1865 = vmatprep.subr.mxu0 0.0
        %1866 = vmatpush2.msra.mxu0 0.0
        %1867 = vmatprep.subr.mxu0 0.0
        %1868 = vmatpush2.msra.mxu0 0.0
        %1869 = vmatprep.subr.mxu0 0.0
        %1870 = vmatpush2.msra.mxu0 0.0
        %1871 = vmatprep.subr.mxu0 0.0
        %1872 = vmatpush2.msra.mxu0 0.0
        %1873 = vmatprep.subr.mxu0 0.0
        %1874 = vmatpush2.msra.mxu0 0.0
        %1875 = vmatprep.subr.mxu0 0.0
        %1876 = vmatpush2.msra.mxu0 0.0
        %1877 = vmatprep.subr.mxu0 0.0
        %1878 = vmatpush2.msra.mxu0 0.0
        %1879 = vmatprep.subr.mxu0 0.0
        %1880 = vmatpush2.msra.mxu0 0.0
        %1881 = vmatprep.subr.mxu0 0.0
        %1882 = vmatpush2.msra.mxu0 0.0
        %1883 = vmatprep.mubr.f32.mxu0 0.0
        %1884 = vmatmul.mubr.f32.gmra.mxu0 %v1814
        %v1885 = vpop.f32.mrf.mxu0
        %v1886 = vadd.f32 0.0, %v1885
        %v1887 = vpop.f32.mrf.mxu0
        %1888 = vdwg.mxu0
        %v1889 = vadd.f32 %v1482, %v1886
        %1890 = vrot.lane.b32.xlu0 %v673, 116
        %v1891 = vpop.permute.xlu0 %1890
        %1892 = vrot.lane.b32.xlu0 %v582, 116
        %v1893 = vpop.permute.xlu0 %1892
        %v1894 = vsel %vm676, %v1891, 0
        %v1896 = vsel %vm676, %v1893, 0
        %1898 = vmatprep.subr.mxu0 0.0
        %1899 = vmatpush1.xpose.msra.mxu0 0.0
        %1900 = vmatprep.subr.mxu0 0.0
        %1901 = vmatpush1.xpose.msra.mxu0 0.0
        %1902 = vmatprep.subr.mxu0 0.0
        %1903 = vmatpush1.xpose.msra.mxu0 0.0
        %1904 = vmatprep.subr.mxu0 0.0
        %1905 = vmatpush1.xpose.msra.mxu0 0.0
        %1906 = vmatprep.subr.mxu0 0.0
        %1907 = vmatpush1.xpose.msra.mxu0 0.0
        %1908 = vmatprep.subr.mxu0 0.0
        %1909 = vmatpush1.xpose.msra.mxu0 0.0
        %1910 = vmatprep.subr.mxu0 0.0
        %1911 = vmatpush1.xpose.msra.mxu0 0.0
        %1912 = vmatprep.subr.mxu0 0.0
        %1913 = vmatpush1.xpose.msra.mxu0 0.0
        %1914 = vmatprep.subr.mxu0 0.0
        %1915 = vmatpush1.xpose.msra.mxu0 0.0
        %1916 = vmatprep.subr.mxu0 0.0
        %1917 = vmatpush1.xpose.msra.mxu0 0.0
        %1918 = vmatprep.subr.mxu0 0.0
        %1919 = vmatpush1.xpose.msra.mxu0 0.0
        %1920 = vmatprep.subr.mxu0 0.0
        %1921 = vmatpush1.xpose.msra.mxu0 0.0
        %1922 = vmatprep.subr.mxu0 0.0
        %1923 = vmatpush1.xpose.msra.mxu0 0.0
        %1924 = vmatprep.subr.mxu0 0.0
        %1925 = vmatpush1.xpose.msra.mxu0 0.0
        %1926 = vmatprep.subr.mxu0 0.0
        %1927 = vmatpush1.xpose.msra.mxu0 0.0
        %1928 = vmatprep.subr.mxu0 0.0
        %1929 = vmatpush1.xpose.msra.mxu0 %v1896
        %1930 = vmatprep.subr.mxu0 0.0
        %1931 = vmatpush2.xpose.msra.mxu0 0.0
        %1932 = vmatprep.subr.mxu0 0.0
        %1933 = vmatpush2.xpose.msra.mxu0 0.0
        %1934 = vmatprep.subr.mxu0 0.0
        %1935 = vmatpush2.xpose.msra.mxu0 0.0
        %1936 = vmatprep.subr.mxu0 0.0
        %1937 = vmatpush2.xpose.msra.mxu0 0.0
        %1938 = vmatprep.subr.mxu0 0.0
        %1939 = vmatpush2.xpose.msra.mxu0 0.0
        %1940 = vmatprep.subr.mxu0 0.0
        %1941 = vmatpush2.xpose.msra.mxu0 0.0
        %1942 = vmatprep.subr.mxu0 0.0
        %1943 = vmatpush2.xpose.msra.mxu0 0.0
        %1944 = vmatprep.subr.mxu0 0.0
        %1945 = vmatpush2.xpose.msra.mxu0 0.0
        %1946 = vmatprep.subr.mxu0 0.0
        %1947 = vmatpush2.xpose.msra.mxu0 0.0
        %1948 = vmatprep.subr.mxu0 0.0
        %1949 = vmatpush2.xpose.msra.mxu0 0.0
        %1950 = vmatprep.subr.mxu0 0.0
        %1951 = vmatpush2.xpose.msra.mxu0 0.0
        %1952 = vmatprep.subr.mxu0 0.0
        %1953 = vmatpush2.xpose.msra.mxu0 0.0
        %1954 = vmatprep.subr.mxu0 0.0
        %1955 = vmatpush2.xpose.msra.mxu0 0.0
        %1956 = vmatprep.subr.mxu0 0.0
        %1957 = vmatpush2.xpose.msra.mxu0 0.0
        %1958 = vmatprep.subr.mxu0 0.0
        %1959 = vmatpush2.xpose.msra.mxu0 0.0
        %1960 = vmatprep.subr.mxu0 0.0
        %1961 = vmatpush2.xpose.msra.mxu0 0.0
        %1962 = vmatprep.mubr.f32.mxu0 0.0
        %1963 = vmatmul.mubr.f32.gmra.mxu0 %v1894
        %v1964 = vpop.f32.mrf.mxu0
        %v1965 = vadd.f32 0.0, %v1964
        %v1966 = vpop.f32.mrf.mxu0
        %1967 = vdwg.mxu0
        %1968 = vrot.lane.b32.xlu0 %v587, 116
        %v1969 = vpop.permute.xlu0 %1968
        %v1970 = vsel %vm676, %v1969, 0
        %1972 = vmatprep.subr.mxu0 0.0
        %1973 = vmatpush1.xpose.msra.mxu0 0.0
        %1974 = vmatprep.subr.mxu0 0.0
        %1975 = vmatpush1.xpose.msra.mxu0 0.0
        %1976 = vmatprep.subr.mxu0 0.0
        %1977 = vmatpush1.xpose.msra.mxu0 0.0
        %1978 = vmatprep.subr.mxu0 0.0
        %1979 = vmatpush1.xpose.msra.mxu0 0.0
        %1980 = vmatprep.subr.mxu0 0.0
        %1981 = vmatpush1.xpose.msra.mxu0 0.0
        %1982 = vmatprep.subr.mxu0 0.0
        %1983 = vmatpush1.xpose.msra.mxu0 0.0
        %1984 = vmatprep.subr.mxu0 0.0
        %1985 = vmatpush1.xpose.msra.mxu0 0.0
        %1986 = vmatprep.subr.mxu0 0.0
        %1987 = vmatpush1.xpose.msra.mxu0 0.0
        %1988 = vmatprep.subr.mxu0 0.0
        %1989 = vmatpush1.xpose.msra.mxu0 0.0
        %1990 = vmatprep.subr.mxu0 0.0
        %1991 = vmatpush1.xpose.msra.mxu0 0.0
        %1992 = vmatprep.subr.mxu0 0.0
        %1993 = vmatpush1.xpose.msra.mxu0 0.0
        %1994 = vmatprep.subr.mxu0 0.0
        %1995 = vmatpush1.xpose.msra.mxu0 0.0
        %1996 = vmatprep.subr.mxu0 0.0
        %1997 = vmatpush1.xpose.msra.mxu0 0.0
        %1998 = vmatprep.subr.mxu0 0.0
        %1999 = vmatpush1.xpose.msra.mxu0 0.0
        %2000 = vmatprep.subr.mxu0 0.0
        %2001 = vmatpush1.xpose.msra.mxu0 0.0
        %2002 = vmatprep.subr.mxu0 0.0
        %2003 = vmatpush1.xpose.msra.mxu0 %v1970
        %2004 = vmatprep.subr.mxu0 0.0
        %2005 = vmatpush2.xpose.msra.mxu0 0.0
        %2006 = vmatprep.subr.mxu0 0.0
        %2007 = vmatpush2.xpose.msra.mxu0 0.0
        %2008 = vmatprep.subr.mxu0 0.0
        %2009 = vmatpush2.xpose.msra.mxu0 0.0
        %2010 = vmatprep.subr.mxu0 0.0
        %2011 = vmatpush2.xpose.msra.mxu0 0.0
        %2012 = vmatprep.subr.mxu0 0.0
        %2013 = vmatpush2.xpose.msra.mxu0 0.0
        %2014 = vmatprep.subr.mxu0 0.0
        %2015 = vmatpush2.xpose.msra.mxu0 0.0
        %2016 = vmatprep.subr.mxu0 0.0
        %2017 = vmatpush2.xpose.msra.mxu0 0.0
        %2018 = vmatprep.subr.mxu0 0.0
        %2019 = vmatpush2.xpose.msra.mxu0 0.0
        %2020 = vmatprep.subr.mxu0 0.0
        %2021 = vmatpush2.xpose.msra.mxu0 0.0
        %2022 = vmatprep.subr.mxu0 0.0
        %2023 = vmatpush2.xpose.msra.mxu0 0.0
        %2024 = vmatprep.subr.mxu0 0.0
        %2025 = vmatpush2.xpose.msra.mxu0 0.0
        %2026 = vmatprep.subr.mxu0 0.0
        %2027 = vmatpush2.xpose.msra.mxu0 0.0
        %2028 = vmatprep.subr.mxu0 0.0
        %2029 = vmatpush2.xpose.msra.mxu0 0.0
        %2030 = vmatprep.subr.mxu0 0.0
        %2031 = vmatpush2.xpose.msra.mxu0 0.0
        %2032 = vmatprep.subr.mxu0 0.0
        %2033 = vmatpush2.xpose.msra.mxu0 0.0
        %2034 = vmatprep.subr.mxu0 0.0
        %2035 = vmatpush2.xpose.msra.mxu0 0.0
        %2036 = vmatprep.mubr.f32.mxu0 0.0
        %2037 = vmatmul.mubr.f32.gmra.mxu0 %v1894
        %v2038 = vpop.f32.mrf.mxu0
        %v2039 = vadd.f32 0.0, %v2038
        %v2040 = vpop.f32.mrf.mxu0
        %2041 = vdwg.mxu0
        %v2042 = vsel %vm826, %v1965, -inf
        %2043 = vmax.xlane.f32.xlu0 %v2042
        %v2044 = vpop.xlane.xlu0 %2043
        %v2045 = vsel %vm826, %v2039, -inf
        %2046 = vmax.xlane.f32.xlu0 %v2045
        %v2047 = vpop.xlane.xlu0 %2046
        %v2048 = vsub.f32 %v1965, %v2044
        %v2049 = vsub.f32 %v2039, %v2047
        %v2050 = vmul.f32 %v2048, 1.442695
        %v2051 = vpow.pop %v2050
        %v2052 = vmul.f32 %v2049, 1.442695
        %v2053 = vpow.pop %v2052
        %v2054 = vsel %vm826, %v2051, 0.0
        %2055 = vadd.xlane.f32.xlu0 %v2054
        %v2056 = vpop.xlane.xlu0 %2055
        %v2057 = vsel %vm826, %v2053, 0.0
        %2058 = vadd.xlane.f32.xlu0 %v2057
        %v2059 = vpop.xlane.xlu0 %2058
        %v2060 = vrcp.pop %v2056
        %v2061 = vmul.f32 %v2051, %v2060
        %v2062 = vrcp.pop %v2059
        %v2063 = vmul.f32 %v2053, %v2062
        %2064 = vrot.lane.b32.xlu0 %v582, 100
        %v2065 = vpop.permute.xlu0 %2064
        %v2068 = vsel %vm852, %v2061, 0
        %2070 = vmatprep.subr.mxu0 0.0
        %2071 = vmatpush1.msra.mxu0 0.0
        %2072 = vmatprep.subr.mxu0 0.0
        %2073 = vmatpush1.msra.mxu0 0.0
        %2074 = vmatprep.subr.mxu0 0.0
        %2075 = vmatpush1.msra.mxu0 0.0
        %2076 = vmatprep.subr.mxu0 0.0
        %2077 = vmatpush1.msra.mxu0 0.0
        %2078 = vmatprep.subr.mxu0 0.0
        %2079 = vmatpush1.msra.mxu0 0.0
        %2080 = vmatprep.subr.mxu0 0.0
        %2081 = vmatpush1.msra.mxu0 0.0
        %2082 = vmatprep.subr.mxu0 0.0
        %2083 = vmatpush1.msra.mxu0 0.0
        %2084 = vmatprep.subr.mxu0 0.0
        %2085 = vmatpush1.msra.mxu0 0.0
        %2086 = vmatprep.subr.mxu0 0.0
        %2087 = vmatpush1.msra.mxu0 0.0
        %2088 = vmatprep.subr.mxu0 0.0
        %2089 = vmatpush1.msra.mxu0 0.0
        %2090 = vmatprep.subr.mxu0 0.0
        %2091 = vmatpush1.msra.mxu0 0.0
        %2092 = vmatprep.subr.mxu0 0.0
        %2093 = vmatpush1.msra.mxu0 0.0
        %2094 = vmatprep.subr.mxu0 0.0
        %2095 = vmatpush1.msra.mxu0 0.0
        %2096 = vmatprep.subr.mxu0 0.0
        %2097 = vmatpush1.msra.mxu0 0.0
        %2098 = vmatprep.subr.mxu0 0.0
        %2099 = vmatpush1.msra.mxu0 0.0
        %2100 = vmatprep.subr.mxu0 0.0
        %2101 = vmatpush1.msra.mxu0 %v2065
        %2102 = vmatprep.subr.mxu0 0.0
        %2103 = vmatpush2.msra.mxu0 0.0
        %2104 = vmatprep.subr.mxu0 0.0
        %2105 = vmatpush2.msra.mxu0 0.0
        %2106 = vmatprep.subr.mxu0 0.0
        %2107 = vmatpush2.msra.mxu0 0.0
        %2108 = vmatprep.subr.mxu0 0.0
        %2109 = vmatpush2.msra.mxu0 0.0
        %2110 = vmatprep.subr.mxu0 0.0
        %2111 = vmatpush2.msra.mxu0 0.0
        %2112 = vmatprep.subr.mxu0 0.0
        %2113 = vmatpush2.msra.mxu0 0.0
        %2114 = vmatprep.subr.mxu0 0.0
        %2115 = vmatpush2.msra.mxu0 0.0
        %2116 = vmatprep.subr.mxu0 0.0
        %2117 = vmatpush2.msra.mxu0 0.0
        %2118 = vmatprep.subr.mxu0 0.0
        %2119 = vmatpush2.msra.mxu0 0.0
        %2120 = vmatprep.subr.mxu0 0.0
        %2121 = vmatpush2.msra.mxu0 0.0
        %2122 = vmatprep.subr.mxu0 0.0
        %2123 = vmatpush2.msra.mxu0 0.0
        %2124 = vmatprep.subr.mxu0 0.0
        %2125 = vmatpush2.msra.mxu0 0.0
        %2126 = vmatprep.subr.mxu0 0.0
        %2127 = vmatpush2.msra.mxu0 0.0
        %2128 = vmatprep.subr.mxu0 0.0
        %2129 = vmatpush2.msra.mxu0 0.0
        %2130 = vmatprep.subr.mxu0 0.0
        %2131 = vmatpush2.msra.mxu0 0.0
        %2132 = vmatprep.subr.mxu0 0.0
        %2133 = vmatpush2.msra.mxu0 0.0
        %2134 = vmatprep.mubr.f32.mxu0 0.0
        %2135 = vmatmul.mubr.f32.gmra.mxu0 %v2068
        %v2136 = vpop.f32.mrf.mxu0
        %v2137 = vadd.f32 0.0, %v2136
        %v2138 = vpop.f32.mrf.mxu0
        %2139 = vdwg.mxu0
        %2140 = vrot.lane.b32.xlu0 %v587, 100
        %v2141 = vpop.permute.xlu0 %2140
        %v2144 = vsel %vm852, %v2063, 0
        %2146 = vmatprep.subr.mxu0 0.0
        %2147 = vmatpush1.msra.mxu0 0.0
        %2148 = vmatprep.subr.mxu0 0.0
        %2149 = vmatpush1.msra.mxu0 0.0
        %2150 = vmatprep.subr.mxu0 0.0
        %2151 = vmatpush1.msra.mxu0 0.0
        %2152 = vmatprep.subr.mxu0 0.0
        %2153 = vmatpush1.msra.mxu0 0.0
        %2154 = vmatprep.subr.mxu0 0.0
        %2155 = vmatpush1.msra.mxu0 0.0
        %2156 = vmatprep.subr.mxu0 0.0
        %2157 = vmatpush1.msra.mxu0 0.0
        %2158 = vmatprep.subr.mxu0 0.0
        %2159 = vmatpush1.msra.mxu0 0.0
        %2160 = vmatprep.subr.mxu0 0.0
        %2161 = vmatpush1.msra.mxu0 0.0
        %2162 = vmatprep.subr.mxu0 0.0
        %2163 = vmatpush1.msra.mxu0 0.0
        %2164 = vmatprep.subr.mxu0 0.0
        %2165 = vmatpush1.msra.mxu0 0.0
        %2166 = vmatprep.subr.mxu0 0.0
        %2167 = vmatpush1.msra.mxu0 0.0
        %2168 = vmatprep.subr.mxu0 0.0
        %2169 = vmatpush1.msra.mxu0 0.0
        %2170 = vmatprep.subr.mxu0 0.0
        %2171 = vmatpush1.msra.mxu0 0.0
        %2172 = vmatprep.subr.mxu0 0.0
        %2173 = vmatpush1.msra.mxu0 0.0
        %2174 = vmatprep.subr.mxu0 0.0
        %2175 = vmatpush1.msra.mxu0 0.0
        %2176 = vmatprep.subr.mxu0 0.0
        %2177 = vmatpush1.msra.mxu0 %v2141
        %2178 = vmatprep.subr.mxu0 0.0
        %2179 = vmatpush2.msra.mxu0 0.0
        %2180 = vmatprep.subr.mxu0 0.0
        %2181 = vmatpush2.msra.mxu0 0.0
        %2182 = vmatprep.subr.mxu0 0.0
        %2183 = vmatpush2.msra.mxu0 0.0
        %2184 = vmatprep.subr.mxu0 0.0
        %2185 = vmatpush2.msra.mxu0 0.0
        %2186 = vmatprep.subr.mxu0 0.0
        %2187 = vmatpush2.msra.mxu0 0.0
        %2188 = vmatprep.subr.mxu0 0.0
        %2189 = vmatpush2.msra.mxu0 0.0
        %2190 = vmatprep.subr.mxu0 0.0
        %2191 = vmatpush2.msra.mxu0 0.0
        %2192 = vmatprep.subr.mxu0 0.0
        %2193 = vmatpush2.msra.mxu0 0.0
        %2194 = vmatprep.subr.mxu0 0.0
        %2195 = vmatpush2.msra.mxu0 0.0
        %2196 = vmatprep.subr.mxu0 0.0
        %2197 = vmatpush2.msra.mxu0 0.0
        %2198 = vmatprep.subr.mxu0 0.0
        %2199 = vmatpush2.msra.mxu0 0.0
        %2200 = vmatprep.subr.mxu0 0.0
        %2201 = vmatpush2.msra.mxu0 0.0
        %2202 = vmatprep.subr.mxu0 0.0
        %2203 = vmatpush2.msra.mxu0 0.0
        %2204 = vmatprep.subr.mxu0 0.0
        %2205 = vmatpush2.msra.mxu0 0.0
        %2206 = vmatprep.subr.mxu0 0.0
        %2207 = vmatpush2.msra.mxu0 0.0
        %2208 = vmatprep.subr.mxu0 0.0
        %2209 = vmatpush2.msra.mxu0 0.0
        %2210 = vmatprep.mubr.f32.mxu0 0.0
        %2211 = vmatmul.mubr.f32.gmra.mxu0 %v2144
        %v2212 = vpop.f32.mrf.mxu0
        %v2213 = vadd.f32 0.0, %v2212
        %v2214 = vpop.f32.mrf.mxu0
        %2215 = vdwg.mxu0
        %v2218 = vcombine.low %v2137, %v2213
        %v2219 = vrot.slane %v675, 4
        %v2220 = vsel %vm676, %v2218, 0
        %v2222 = vsel %vm1335, %v2219, 0
        %2224 = vmatprep.subr.mxu0 0.0
        %2225 = vmatpush1.msra.mxu0 0.0
        %2226 = vmatprep.subr.mxu0 0.0
        %2227 = vmatpush1.msra.mxu0 0.0
        %2228 = vmatprep.subr.mxu0 0.0
        %2229 = vmatpush1.msra.mxu0 0.0
        %2230 = vmatprep.subr.mxu0 0.0
        %2231 = vmatpush1.msra.mxu0 0.0
        %2232 = vmatprep.subr.mxu0 0.0
        %2233 = vmatpush1.msra.mxu0 0.0
        %2234 = vmatprep.subr.mxu0 0.0
        %2235 = vmatpush1.msra.mxu0 0.0
        %2236 = vmatprep.subr.mxu0 0.0
        %2237 = vmatpush1.msra.mxu0 0.0
        %2238 = vmatprep.subr.mxu0 0.0
        %2239 = vmatpush1.msra.mxu0 0.0
        %2240 = vmatprep.subr.mxu0 0.0
        %2241 = vmatpush1.msra.mxu0 0.0
        %2242 = vmatprep.subr.mxu0 0.0
        %2243 = vmatpush1.msra.mxu0 0.0
        %2244 = vmatprep.subr.mxu0 0.0
        %2245 = vmatpush1.msra.mxu0 0.0
        %2246 = vmatprep.subr.mxu0 0.0
        %2247 = vmatpush1.msra.mxu0 0.0
        %2248 = vmatprep.subr.mxu0 0.0
        %2249 = vmatpush1.msra.mxu0 0.0
        %2250 = vmatprep.subr.mxu0 0.0
        %2251 = vmatpush1.msra.mxu0 0.0
        %2252 = vmatprep.subr.mxu0 0.0
        %2253 = vmatpush1.msra.mxu0 0.0
        %2254 = vmatprep.subr.mxu0 0.0
        %2255 = vmatpush1.msra.mxu0 %v2222
        %2256 = vmatprep.subr.mxu0 0.0
        %2257 = vmatpush2.msra.mxu0 0.0
        %2258 = vmatprep.subr.mxu0 0.0
        %2259 = vmatpush2.msra.mxu0 0.0
        %2260 = vmatprep.subr.mxu0 0.0
        %2261 = vmatpush2.msra.mxu0 0.0
        %2262 = vmatprep.subr.mxu0 0.0
        %2263 = vmatpush2.msra.mxu0 0.0
        %2264 = vmatprep.subr.mxu0 0.0
        %2265 = vmatpush2.msra.mxu0 0.0
        %2266 = vmatprep.subr.mxu0 0.0
        %2267 = vmatpush2.msra.mxu0 0.0
        %2268 = vmatprep.subr.mxu0 0.0
        %2269 = vmatpush2.msra.mxu0 0.0
        %2270 = vmatprep.subr.mxu0 0.0
        %2271 = vmatpush2.msra.mxu0 0.0
        %2272 = vmatprep.subr.mxu0 0.0
        %2273 = vmatpush2.msra.mxu0 0.0
        %2274 = vmatprep.subr.mxu0 0.0
        %2275 = vmatpush2.msra.mxu0 0.0
        %2276 = vmatprep.subr.mxu0 0.0
        %2277 = vmatpush2.msra.mxu0 0.0
        %2278 = vmatprep.subr.mxu0 0.0
        %2279 = vmatpush2.msra.mxu0 0.0
        %2280 = vmatprep.subr.mxu0 0.0
        %2281 = vmatpush2.msra.mxu0 0.0
        %2282 = vmatprep.subr.mxu0 0.0
        %2283 = vmatpush2.msra.mxu0 0.0
        %2284 = vmatprep.subr.mxu0 0.0
        %2285 = vmatpush2.msra.mxu0 0.0
        %2286 = vmatprep.subr.mxu0 0.0
        %2287 = vmatpush2.msra.mxu0 0.0
        %2288 = vmatprep.mubr.f32.mxu0 0.0
        %2289 = vmatmul.mubr.f32.gmra.mxu0 %v2220
        %v2290 = vpop.f32.mrf.mxu0
        %v2291 = vadd.f32 0.0, %v2290
        %v2292 = vpop.f32.mrf.mxu0
        %2293 = vdwg.mxu0
        %v2294 = vadd.f32 %v1889, %v2291
        %v2295 = vld [vmem:[#allocation8] sm:$0x1]
        %v2297 = vlaneseq
        %v2298 = vshrl.u32 %v2297, 7
        %v2299 = vsub.s32 0, %v2298
        %v2300 = vrot.slane %v2295, %v2299
        %v2302 = vadd.f32 %v2294, %v2300
        %v2304 = vcombine.high %v2302, %v2302
        %v2306 = vadd.f32 %v2302, %v590
        %v2307 = vadd.f32 %v2304, %v590
        %v2308 = vld [vmem:[#allocation10] sm:$0xff]
        %v2309 = vld [vmem:[#allocation10 + $0x8] sm:$0xff]
        %v2310 = vld [vmem:[#allocation11] sm:$0x1]
        %v2312 = vlaneseq
        %v2313 = vshrl.u32 %v2312, 7
        %v2314 = vsub.s32 0, %v2313
        %v2315 = vrot.slane %v2310, %v2314
        %v2319 = vcombine.low %v2306, %v2307
        %v2320 = vsel %vm508, %v2319, 0
        %2322 = vmatprep.subr.mxu0 0.0
        %2323 = vmatpush1.msra.mxu0 0.0
        %2324 = vmatprep.subr.mxu0 0.0
        %2325 = vmatpush1.msra.mxu0 0.0
        %2326 = vmatprep.subr.mxu0 0.0
        %2327 = vmatpush1.msra.mxu0 0.0
        %2328 = vmatprep.subr.mxu0 0.0
        %2329 = vmatpush1.msra.mxu0 0.0
        %2330 = vmatprep.subr.mxu0 0.0
        %2331 = vmatpush1.msra.mxu0 0.0
        %2332 = vmatprep.subr.mxu0 0.0
        %2333 = vmatpush1.msra.mxu0 0.0
        %2334 = vmatprep.subr.mxu0 0.0
        %2335 = vmatpush1.msra.mxu0 0.0
        %2336 = vmatprep.subr.mxu0 0.0
        %2337 = vmatpush1.msra.mxu0 0.0
        %2338 = vmatprep.subr.mxu0 0.0
        %2339 = vmatpush1.msra.mxu0 0.0
        %2340 = vmatprep.subr.mxu0 0.0
        %2341 = vmatpush1.msra.mxu0 0.0
        %2342 = vmatprep.subr.mxu0 0.0
        %2343 = vmatpush1.msra.mxu0 0.0
        %2344 = vmatprep.subr.mxu0 0.0
        %2345 = vmatpush1.msra.mxu0 0.0
        %2346 = vmatprep.subr.mxu0 0.0
        %2347 = vmatpush1.msra.mxu0 0.0
        %2348 = vmatprep.subr.mxu0 0.0
        %2349 = vmatpush1.msra.mxu0 0.0
        %2350 = vmatprep.subr.mxu0 0.0
        %2351 = vmatpush1.msra.mxu0 %v2309
        %2352 = vmatprep.subr.mxu0 0.0
        %2353 = vmatpush1.msra.mxu0 %v2308
        %2354 = vmatprep.subr.mxu0 0.0
        %2355 = vmatpush2.msra.mxu0 0.0
        %2356 = vmatprep.subr.mxu0 0.0
        %2357 = vmatpush2.msra.mxu0 0.0
        %2358 = vmatprep.subr.mxu0 0.0
        %2359 = vmatpush2.msra.mxu0 0.0
        %2360 = vmatprep.subr.mxu0 0.0
        %2361 = vmatpush2.msra.mxu0 0.0
        %2362 = vmatprep.subr.mxu0 0.0
        %2363 = vmatpush2.msra.mxu0 0.0
        %2364 = vmatprep.subr.mxu0 0.0
        %2365 = vmatpush2.msra.mxu0 0.0
        %2366 = vmatprep.subr.mxu0 0.0
        %2367 = vmatpush2.msra.mxu0 0.0
        %2368 = vmatprep.subr.mxu0 0.0
        %2369 = vmatpush2.msra.mxu0 0.0
        %2370 = vmatprep.subr.mxu0 0.0
        %2371 = vmatpush2.msra.mxu0 0.0
        %2372 = vmatprep.subr.mxu0 0.0
        %2373 = vmatpush2.msra.mxu0 0.0
        %2374 = vmatprep.subr.mxu0 0.0
        %2375 = vmatpush2.msra.mxu0 0.0
        %2376 = vmatprep.subr.mxu0 0.0
        %2377 = vmatpush2.msra.mxu0 0.0
        %2378 = vmatprep.subr.mxu0 0.0
        %2379 = vmatpush2.msra.mxu0 0.0
        %2380 = vmatprep.subr.mxu0 0.0
        %2381 = vmatpush2.msra.mxu0 0.0
        %2382 = vmatprep.subr.mxu0 0.0
        %2383 = vmatpush2.msra.mxu0 0.0
        %2384 = vmatprep.subr.mxu0 0.0
        %2385 = vmatpush2.msra.mxu0 0.0
        %2386 = vmatprep.mubr.f32.mxu0 0.0
        %2387 = vmatmul.mubr.f32.gmra.mxu0 %v2320
        %v2388 = vpop.f32.mrf.mxu0
        %v2389 = vadd.f32 %v2315, %v2388
        %v2390 = vpop.f32.mrf.mxu0
        %2391 = vdwg.mxu0
        %v2392 = vmax.f32 %v2389, 0.0
        %v2393 = vld [vmem:[%s10] sm:$0xff]
        %v2394 = vld [vmem:[%s10 + $0x8] sm:$0xff]
        %v2395 = vld [vmem:[%s10 + $0x10] sm:$0xff]
        %v2396 = vld [vmem:[%s10 + $0x18] sm:$0xff]
        %v2397 = vld [vmem:[%s11] sm:$0x1]
        %v2399 = vlaneseq
        %v2400 = vshrl.u32 %v2399, 7
        %v2401 = vsub.s32 0, %v2400
        %v2402 = vrot.slane %v2397, %v2401
        %vm2404 = vcmask 261120
        %v2406 = vsel %vm2404, %v2392, 0
        %2408 = vmatprep.subr.mxu0 0.0
        %2409 = vmatpush1.msra.mxu0 0.0
        %2410 = vmatprep.subr.mxu0 0.0
        %2411 = vmatpush1.msra.mxu0 0.0
        %2412 = vmatprep.subr.mxu0 0.0
        %2413 = vmatpush1.msra.mxu0 0.0
        %2414 = vmatprep.subr.mxu0 0.0
        %2415 = vmatpush1.msra.mxu0 0.0
        %2416 = vmatprep.subr.mxu0 0.0
        %2417 = vmatpush1.msra.mxu0 0.0
        %2418 = vmatprep.subr.mxu0 0.0
        %2419 = vmatpush1.msra.mxu0 0.0
        %2420 = vmatprep.subr.mxu0 0.0
        %2421 = vmatpush1.msra.mxu0 0.0
        %2422 = vmatprep.subr.mxu0 0.0
        %2423 = vmatpush1.msra.mxu0 0.0
        %2424 = vmatprep.subr.mxu0 0.0
        %2425 = vmatpush1.msra.mxu0 0.0
        %2426 = vmatprep.subr.mxu0 0.0
        %2427 = vmatpush1.msra.mxu0 0.0
        %2428 = vmatprep.subr.mxu0 0.0
        %2429 = vmatpush1.msra.mxu0 0.0
        %2430 = vmatprep.subr.mxu0 0.0
        %2431 = vmatpush1.msra.mxu0 0.0
        %2432 = vmatprep.subr.mxu0 0.0
        %2433 = vmatpush1.msra.mxu0 %v2396
        %2434 = vmatprep.subr.mxu0 0.0
        %2435 = vmatpush1.msra.mxu0 %v2395
        %2436 = vmatprep.subr.mxu0 0.0
        %2437 = vmatpush1.msra.mxu0 %v2394
        %2438 = vmatprep.subr.mxu0 0.0
        %2439 = vmatpush1.msra.mxu0 %v2393
        %2440 = vmatprep.subr.mxu0 0.0
        %2441 = vmatpush2.msra.mxu0 0.0
        %2442 = vmatprep.subr.mxu0 0.0
        %2443 = vmatpush2.msra.mxu0 0.0
        %2444 = vmatprep.subr.mxu0 0.0
        %2445 = vmatpush2.msra.mxu0 0.0
        %2446 = vmatprep.subr.mxu0 0.0
        %2447 = vmatpush2.msra.mxu0 0.0
        %2448 = vmatprep.subr.mxu0 0.0
        %2449 = vmatpush2.msra.mxu0 0.0
        %2450 = vmatprep.subr.mxu0 0.0
        %2451 = vmatpush2.msra.mxu0 0.0
        %2452 = vmatprep.subr.mxu0 0.0
        %2453 = vmatpush2.msra.mxu0 0.0
        %2454 = vmatprep.subr.mxu0 0.0
        %2455 = vmatpush2.msra.mxu0 0.0
        %2456 = vmatprep.subr.mxu0 0.0
        %2457 = vmatpush2.msra.mxu0 0.0
        %2458 = vmatprep.subr.mxu0 0.0
        %2459 = vmatpush2.msra.mxu0 0.0
        %2460 = vmatprep.subr.mxu0 0.0
        %2461 = vmatpush2.msra.mxu0 0.0
        %2462 = vmatprep.subr.mxu0 0.0
        %2463 = vmatpush2.msra.mxu0 0.0
        %2464 = vmatprep.subr.mxu0 0.0
        %2465 = vmatpush2.msra.mxu0 0.0
        %2466 = vmatprep.subr.mxu0 0.0
        %2467 = vmatpush2.msra.mxu0 0.0
        %2468 = vmatprep.subr.mxu0 0.0
        %2469 = vmatpush2.msra.mxu0 0.0
        %2470 = vmatprep.subr.mxu0 0.0
        %2471 = vmatpush2.msra.mxu0 0.0
        %2472 = vmatprep.mubr.f32.mxu0 0.0
        %2473 = vmatmul.mubr.f32.gmra.mxu0 %v2406
        %v2474 = vpop.f32.mrf.mxu0
        %v2475 = vadd.f32 %v2402, %v2474
        %v2476 = vpop.f32.mrf.mxu0
        %2477 = vdwg.mxu0
        %v2479 = vcombine.high %v2475, %v2475
        %v2481 = vadd.f32 %v2306, %v2475
        %v2482 = vadd.f32 %v2307, %v2479
        %vm2483 = vcmask 125952
        %2484 = vst.msk [vmem:[%s489] sm:$0xf] %vm2483, %v2481
        %2485 = vst.msk [vmem:[%s489 + $0x4] sm:$0xf] %vm2483, %v2482
        %s2486 = sand.u32 %s295, 1
        %s2487 = scalar_lea.sflag [#allocation4], %s2486
        %s2488 = sand.u32 %s295, 1
        %s2489 = smul.addr %s2488, 8
        %s2490 = scalar_lea.vmem [#allocation13], %s2489
        // Predicated region
        $region93: #{tpu_custom_call.1} parent=67 // pred_check
          %p2491 = pneg %p305
        $region94: #{tpu_custom_call.1} parent=67 // pred_check_branch
          %2493 = sbr.rel (%p2491) target = $region96
        $region95: #{tpu_custom_call.1} parent=67 // pred_region
          %s2494 = smul.u32 2, %s30
          %s2496 = ssub.s32 128, 128
          %2497 = vsyncadd %s2487, %s2496
          %s2498 = smul.addr %s2494, 64
          %s2499 = scalar_lea.hbm %s12, %s2498
          %s2500 = sshll.u32 %s2490, 4
          %s2501 = int_to_ptr.vmem [resolvable:$true] %s2500
          %2506 = dma.vmem_to_hbm [thread:$0]  %s2501, 128, %s2499, %s2487, 64, 64, 4
        $region96: #{tpu_custom_call.1} parent=67 // pred_fallthru
          _
      $region68: #{tpu_custom_call.1} parent=5 // pred_fallthru
        _
      %p2507 = scmp.le.s32.totalorder 2, %s25
      // Predicated region
      $region97: #{tpu_custom_call.1} parent=5 // pred_check
        %p2508 = pneg %p2507
      $region98: #{tpu_custom_call.1} parent=5 // pred_check_branch
        %2510 = sbr.rel (%p2508) target = $region100
      $region99: #{tpu_custom_call.1} parent=5 // pred_region
        %s2511 = ssub.s32 %s25, 2
        // Predicated region
        $region101: #{tpu_custom_call.1} parent=99 // pred_check
          %p2512 = pneg %p311
        $region102: #{tpu_custom_call.1} parent=99 // pred_check_branch
          %2514 = sbr.rel (%p2512) target = $region104
        $region103: #{tpu_custom_call.1} parent=99 // pred_region
          %s2515 = sand.u32 %s296, 1
          %s2516 = scalar_lea.sflag [#allocation4], %s2515
          %s2517 = sand.u32 %s296, 1
          %s2518 = smul.addr %s2517, 8
          %s2519 = scalar_lea.vmem [#allocation13], %s2518
          %2520 = dma.done %s2516, 128
        $region104: #{tpu_custom_call.1} parent=99 // pred_fallthru
          _
      $region100: #{tpu_custom_call.1} parent=5 // pred_fallthru
        _
    $region6: #{tpu_custom_call.1} parent=1 // loop_footer
      %s29 = sadd.s32 1, %s25
    $region7: #{tpu_custom_call.1} parent=1 // loop_footer_branch
      %24 = sbr.rel target = $region3
    $region8: #{tpu_custom_call.1} parent=1 // loop_exit
      _
    %2521 = vsyncpa [#allocation3], 1
    %s2522 = scalar_lea.sflag [#allocation3], 1
    %2523 = vsyncpa %s2522, 1
    %2524 = vsyncpa [#allocation6], 1
    %2525 = vsyncpa [#allocation9], 1
    %2526 = vsyncpa [#allocation12], 1
    %2527 = vsyncpa [#allocation4], 1
    %s2528 = scalar_lea.sflag [#allocation4], 1
    %2529 = vsyncpa %s2528, 1

</llo_original>
